<compile_context>
chip_gen: v7x
topology: tpu7x:2x2x1
jax: 0.10.0
libtpu: 0.0.40
codegen_flags: <defaults>
</compile_context>

<pallas_src>
import functools

import jax
import jax.numpy as jnp
from jax.experimental import pallas as pl
from jax.experimental.pallas import tpu as pltpu

BN_EPS = 1e-5


def _conv3x3_same(hs, w_mat):
    """3x3 SAME conv as a single im2col matmul.

    hs:    (B, Hs, Ws, C) activations (value, not a ref).
    w_mat: (9*C, Co) weights, rows ordered (dy, dx, ci) — i.e. HWIO reshaped.
    Returns (B*Hs*Ws, Co) float32.
    """
    B, Hs, Ws, C = hs.shape
    zw = jnp.zeros((B, Hs, 1, C), hs.dtype)
    hp = jnp.concatenate([zw, hs, zw], axis=2)            # (B, Hs, Ws+2, C)
    zh = jnp.zeros((B, 1, Ws + 2, C), hs.dtype)
    hp = jnp.concatenate([zh, hp, zh], axis=1)            # (B, Hs+2, Ws+2, C)

    wins = [hp[:, dy:dy + Hs, dx:dx + Ws, :]
            for dy in range(3) for dx in range(3)]        # 9 x (B, Hs, Ws, C)
    patch = jnp.concatenate(wins, axis=-1)                # (B, Hs, Ws, 9*C)
    patch = patch.reshape(B * Hs * Ws, 9 * C)
    return jnp.dot(patch, w_mat, preferred_element_type=jnp.float32)


def _bn_relu(y, gamma, beta):
    """Training-mode BatchNorm (batch stats, biased var, eps=1e-5) folded into a
    single per-channel scale/shift, followed by ReLU."""
    m = jnp.mean(y, axis=0, keepdims=True)
    v = jnp.mean((y - m) * (y - m), axis=0, keepdims=True)
    s = gamma * jax.lax.rsqrt(v + BN_EPS)
    t = beta - m * s
    return jnp.maximum(y * s + t, 0.0)


def _down_kernel(x_ref, w1_ref, g1_ref, be1_ref, w2_ref, g2_ref, be2_ref, o_ref,
                 *, cin):
    B, H, WC = x_ref.shape
    W = WC // cin
    H2, W2 = H // 2, W // 2
    Cmid = g1_ref.shape[-1]

    # ---- MaxPool2d(kernel_size=2, stride=2); x arrives as (B, H, W*Cin). ----
    x = x_ref[...].reshape(B, H, W2, 2 * cin)
    pw = jnp.maximum(x[..., :cin], x[..., cin:])          # pool along W -> (B, H, W2, Cin)
    pr = pw.reshape(B, H2, 2, W2, cin)
    p = jnp.maximum(pr[:, :, 0], pr[:, :, 1])             # pool along H -> (B, H2, W2, Cin)

    # ---- Conv1 (one im2col matmul) + BN(batch stats) + ReLU ----
    # Conv bias omitted: exactly cancelled by BN mean subtraction (training mode).
    y1 = _conv3x3_same(p, w1_ref[...])                    # (N, Cmid) f32
    y1 = _bn_relu(y1, g1_ref[...], be1_ref[...])

    # ---- Conv2 (one im2col matmul) + BN + ReLU ----
    y2 = _conv3x3_same(y1.reshape(B, H2, W2, Cmid), w2_ref[...])   # (N, Cpad)
    y2 = _bn_relu(y2, g2_ref[...], be2_ref[...])

    # Lane-dense store: last dim is padded to a multiple of 128 by the wrapper.
    o_ref[...] = y2.reshape(*o_ref.shape)


def down_forward(x_nchw, params):
    """Down.forward. x_nchw: (B, Cin, H, W) float32. Returns (B, Cout, H//2, W//2)."""
    (w1, b1, g1, be1, w2, b2, g2, be2) = params
    # b1/b2 are intentionally unused: under training-mode BN the conv bias is
    # exactly cancelled by the mean subtraction. Keep them if switching to
    # eval-mode BN with running statistics.
    del b1, b2

    B, Cin, H, W = x_nchw.shape
    H2, W2 = H // 2, W // 2
    Cmid = w1.shape[-1]
    Cout = w2.shape[-1]
    Cpad = ((Cout + 127) // 128) * 128                    # lane-dense output channels

    # Layout plumbing only: NCHW -> NHWC, then flatten (W, Cin) onto the minor axis.
    x_nhwc = jnp.transpose(x_nchw, (0, 2, 3, 1)).astype(jnp.float32)
    x_flat = x_nhwc.reshape(B, H, W * Cin)

    # Kernel-form params: HWIO conv weights -> (9*Ci, Co); BN vectors -> (1, C).
    w1_k = w1.reshape(9 * Cin, Cmid).astype(jnp.float32)
    w2_k = jnp.zeros((9 * Cmid, Cpad), jnp.float32).at[:, :Cout].set(
        w2.reshape(9 * Cmid, Cout).astype(jnp.float32))
    g1_k = g1.reshape(1, Cmid).astype(jnp.float32)
    be1_k = be1.reshape(1, Cmid).astype(jnp.float32)
    g2_k = jnp.zeros((1, Cpad), jnp.float32).at[:, :Cout].set(g2.astype(jnp.float32))
    be2_k = jnp.zeros((1, Cpad), jnp.float32).at[:, :Cout].set(be2.astype(jnp.float32))

    vmem = pl.BlockSpec(memory_space=pltpu.MemorySpace.VMEM)
    out_p = pl.pallas_call(
        functools.partial(_down_kernel, cin=Cin),
        out_shape=jax.ShapeDtypeStruct((B, H2, W2, Cpad), jnp.float32),
        in_specs=[vmem] * 7,
        out_specs=vmem,
    )(x_flat, w1_k, g1_k, be1_k, w2_k, g2_k, be2_k)

    out_nhwc = out_p[..., :Cout]
    return jnp.transpose(out_nhwc, (0, 3, 1, 2))


def _ref_forward(x_nchw, params):
    """Pure-JAX reference (same semantics, biases included), for correctness check."""
    (w1, b1, g1, be1, w2, b2, g2, be2) = params
    x = jnp.transpose(x_nchw, (0, 2, 3, 1)).astype(jnp.float32)
    p = jax.lax.reduce_window(x, -jnp.inf, jax.lax.max,
                              (1, 2, 2, 1), (1, 2, 2, 1), "VALID")

    def block(h, w_hwio, b, g, be):
        y = jax.lax.conv_general_dilated(
            h, w_hwio, (1, 1), "SAME",
            dimension_numbers=("NHWC", "HWIO", "NHWC")) + b
        m = jnp.mean(y, axis=(0, 1, 2), keepdims=True)
        v = jnp.mean((y - m) ** 2, axis=(0, 1, 2), keepdims=True)
        y = (y - m) / jnp.sqrt(v + BN_EPS) * g + be
        return jnp.maximum(y, 0.0)

    h = block(p, w1, b1, g1, be1)
    h = block(h, w2, b2, g2, be2)
    return jnp.transpose(h, (0, 3, 1, 2))


def init_params(key, in_channels, out_channels):
    mid_channels = out_channels  # DoubleConv default
    ks = jax.random.split(key, 8)
    w1 = 0.2 * jax.random.normal(ks[0], (3, 3, in_channels, mid_channels), jnp.float32)
    b1 = 0.1 * jax.random.normal(ks[1], (mid_channels,), jnp.float32)
    g1 = 1.0 + 0.1 * jax.random.normal(ks[2], (mid_channels,), jnp.float32)
    be1 = 0.1 * jax.random.normal(ks[3], (mid_channels,), jnp.float32)
    w2 = 0.2 * jax.random.normal(ks[4], (3, 3, mid_channels, out_channels), jnp.float32)
    b2 = 0.1 * jax.random.normal(ks[5], (out_channels,), jnp.float32)
    g2 = 1.0 + 0.1 * jax.random.normal(ks[6], (out_channels,), jnp.float32)
    be2 = 0.1 * jax.random.normal(ks[7], (out_channels,), jnp.float32)
    return (w1, b1, g1, be1, w2, b2, g2, be2)


if __name__ == "__main__":
    key = jax.random.PRNGKey(0)
    k_x, k_p = jax.random.split(key)

    B, Cin, Cout, H, W = 2, 4, 8, 16, 16
    x = jax.random.normal(k_x, (B, Cin, H, W), jnp.float32)   # NCHW like PyTorch
    params = init_params(k_p, Cin, Cout)

    out = jax.block_until_ready(down_forward(x, params))
    ref = jax.block_until_ready(_ref_forward(x, params))

    assert out.shape == (B, Cout, H // 2, W // 2), out.shape
    assert jnp.allclose(out, ref, atol=1e-3, rtol=1e-3), (
        float(jnp.max(jnp.abs(out - ref))))
    print("KERNEL_OK")
</pallas_src>

<mosaic_0001>
module attributes {stable_mosaic.version = 11 : i64} {
  func.func @_down_kernel(%arg0: memref<2x16x64xf32, #tpu.memory_space<vmem>>, %arg1: memref<36x8xf32, #tpu.memory_space<vmem>>, %arg2: memref<1x8xf32, #tpu.memory_space<vmem>>, %arg3: memref<1x8xf32, #tpu.memory_space<vmem>>, %arg4: memref<72x128xf32, #tpu.memory_space<vmem>>, %arg5: memref<1x128xf32, #tpu.memory_space<vmem>>, %arg6: memref<1x128xf32, #tpu.memory_space<vmem>>, %arg7: memref<2x8x8x128xf32, #tpu.memory_space<vmem>>) attributes {dimension_semantics = [], scalar_prefetch = 0 : i64, scratch_operands = 0 : i64, tpu.core_type = #tpu.core_type<tc>} {
    %c0 = arith.constant 0 : index
    %c0_0 = arith.constant 0 : index
    %c0_1 = arith.constant 0 : index
    %0 = vector.load %arg0[%c0, %c0_0, %c0_1] : memref<2x16x64xf32, #tpu.memory_space<vmem>>, vector<2x16x64xf32>
    %1 = vector.shape_cast %0 : vector<2x16x64xf32> to vector<2x16x8x8xf32>
    %2 = vector.extract_strided_slice %1 {offsets = [0, 0, 0, 0], sizes = [2, 16, 8, 4], strides = [1, 1, 1, 1]} : vector<2x16x8x8xf32> to vector<2x16x8x4xf32>
    %3 = vector.extract_strided_slice %1 {offsets = [0, 0, 0, 4], sizes = [2, 16, 8, 4], strides = [1, 1, 1, 1]} : vector<2x16x8x8xf32> to vector<2x16x8x4xf32>
    %4 = arith.maximumf %2, %3 : vector<2x16x8x4xf32>
    %5 = vector.shape_cast %4 : vector<2x16x8x4xf32> to vector<2x8x2x8x4xf32>
    %6 = vector.extract_strided_slice %5 {offsets = [0, 0, 0, 0, 0], sizes = [2, 8, 1, 8, 4], strides = [1, 1, 1, 1, 1]} : vector<2x8x2x8x4xf32> to vector<2x8x1x8x4xf32>
    %7 = vector.shape_cast %6 : vector<2x8x1x8x4xf32> to vector<2x8x8x4xf32>
    %8 = vector.extract_strided_slice %5 {offsets = [0, 0, 1, 0, 0], sizes = [2, 8, 1, 8, 4], strides = [1, 1, 1, 1, 1]} : vector<2x8x2x8x4xf32> to vector<2x8x1x8x4xf32>
    %9 = vector.shape_cast %8 : vector<2x8x1x8x4xf32> to vector<2x8x8x4xf32>
    %10 = arith.maximumf %7, %9 : vector<2x8x8x4xf32>
    %c0_2 = arith.constant 0 : index
    %c0_3 = arith.constant 0 : index
    %11 = vector.load %arg1[%c0_2, %c0_3] : memref<36x8xf32, #tpu.memory_space<vmem>>, vector<36x8xf32>
    %cst = arith.constant 0.000000e+00 : f32
    %12 = vector.broadcast %cst : f32 to vector<2x8x1x4xf32>
    %13 = tpu.concatenate %12, %10, %12 in 2 : vector<2x8x1x4xf32>, vector<2x8x8x4xf32>, vector<2x8x1x4xf32> -> vector<2x8x10x4xf32>
    %cst_4 = arith.constant 0.000000e+00 : f32
    %14 = vector.broadcast %cst_4 : f32 to vector<2x1x10x4xf32>
    %15 = tpu.concatenate %14, %13, %14 in 1 : vector<2x1x10x4xf32>, vector<2x8x10x4xf32>, vector<2x1x10x4xf32> -> vector<2x10x10x4xf32>
    %16 = vector.extract_strided_slice %15 {offsets = [0, 0, 0, 0], sizes = [2, 8, 8, 4], strides = [1, 1, 1, 1]} : vector<2x10x10x4xf32> to vector<2x8x8x4xf32>
    %17 = vector.extract_strided_slice %15 {offsets = [0, 0, 1, 0], sizes = [2, 8, 8, 4], strides = [1, 1, 1, 1]} : vector<2x10x10x4xf32> to vector<2x8x8x4xf32>
    %18 = vector.extract_strided_slice %15 {offsets = [0, 0, 2, 0], sizes = [2, 8, 8, 4], strides = [1, 1, 1, 1]} : vector<2x10x10x4xf32> to vector<2x8x8x4xf32>
    %19 = vector.extract_strided_slice %15 {offsets = [0, 1, 0, 0], sizes = [2, 8, 8, 4], strides = [1, 1, 1, 1]} : vector<2x10x10x4xf32> to vector<2x8x8x4xf32>
    %20 = vector.extract_strided_slice %15 {offsets = [0, 1, 1, 0], sizes = [2, 8, 8, 4], strides = [1, 1, 1, 1]} : vector<2x10x10x4xf32> to vector<2x8x8x4xf32>
    %21 = vector.extract_strided_slice %15 {offsets = [0, 1, 2, 0], sizes = [2, 8, 8, 4], strides = [1, 1, 1, 1]} : vector<2x10x10x4xf32> to vector<2x8x8x4xf32>
    %22 = vector.extract_strided_slice %15 {offsets = [0, 2, 0, 0], sizes = [2, 8, 8, 4], strides = [1, 1, 1, 1]} : vector<2x10x10x4xf32> to vector<2x8x8x4xf32>
    %23 = vector.extract_strided_slice %15 {offsets = [0, 2, 1, 0], sizes = [2, 8, 8, 4], strides = [1, 1, 1, 1]} : vector<2x10x10x4xf32> to vector<2x8x8x4xf32>
    %24 = vector.extract_strided_slice %15 {offsets = [0, 2, 2, 0], sizes = [2, 8, 8, 4], strides = [1, 1, 1, 1]} : vector<2x10x10x4xf32> to vector<2x8x8x4xf32>
    %25 = tpu.concatenate %16, %17, %18, %19, %20, %21, %22, %23, %24 in 3 : vector<2x8x8x4xf32>, vector<2x8x8x4xf32>, vector<2x8x8x4xf32>, vector<2x8x8x4xf32>, vector<2x8x8x4xf32>, vector<2x8x8x4xf32>, vector<2x8x8x4xf32>, vector<2x8x8x4xf32>, vector<2x8x8x4xf32> -> vector<2x8x8x36xf32>
    %26 = vector.shape_cast %25 : vector<2x8x8x36xf32> to vector<128x36xf32>
    %cst_5 = arith.constant dense<0.000000e+00> : vector<128x8xf32>
    %27 = tpu.matmul %26, %11, %cst_5 {dimension_numbers = #tpu.dot_dimension_numbers<[1], [0], [0], [1], [0, 0, 1, 1], [], []>} : vector<128x36xf32>, vector<36x8xf32>, vector<128x8xf32> -> vector<128x8xf32>
    %c0_6 = arith.constant 0 : index
    %c0_7 = arith.constant 0 : index
    %28 = vector.load %arg2[%c0_6, %c0_7] : memref<1x8xf32, #tpu.memory_space<vmem>>, vector<1x8xf32>
    %c0_8 = arith.constant 0 : index
    %c0_9 = arith.constant 0 : index
    %29 = vector.load %arg3[%c0_8, %c0_9] : memref<1x8xf32, #tpu.memory_space<vmem>>, vector<1x8xf32>
    %cst_10 = arith.constant dense<0.000000e+00> : vector<8xf32>
    %30 = vector.multi_reduction <add>, %27, %cst_10 [0] : vector<128x8xf32> to vector<8xf32>
    %31 = vector.shape_cast %30 : vector<8xf32> to vector<1x8xf32>
    %cst_11 = arith.constant 1.280000e+02 : f32
    %32 = vector.broadcast %cst_11 : f32 to vector<1x8xf32>
    %33 = arith.divf %31, %32 : vector<1x8xf32>
    %34 = vector.broadcast %33 : vector<1x8xf32> to vector<128x8xf32>
    %35 = arith.subf %27, %34 : vector<128x8xf32>
    %36 = vector.broadcast %33 : vector<1x8xf32> to vector<128x8xf32>
    %37 = arith.subf %27, %36 : vector<128x8xf32>
    %38 = arith.mulf %35, %37 : vector<128x8xf32>
    %cst_12 = arith.constant dense<0.000000e+00> : vector<8xf32>
    %39 = vector.multi_reduction <add>, %38, %cst_12 [0] : vector<128x8xf32> to vector<8xf32>
    %40 = vector.shape_cast %39 : vector<8xf32> to vector<1x8xf32>
    %cst_13 = arith.constant 1.280000e+02 : f32
    %41 = vector.broadcast %cst_13 : f32 to vector<1x8xf32>
    %42 = arith.divf %40, %41 : vector<1x8xf32>
    %cst_14 = arith.constant 9.99999974E-6 : f32
    %43 = vector.broadcast %cst_14 : f32 to vector<1x8xf32>
    %44 = arith.addf %42, %43 : vector<1x8xf32>
    %45 = math.rsqrt %44 : vector<1x8xf32>
    %46 = arith.mulf %28, %45 : vector<1x8xf32>
    %47 = arith.mulf %33, %46 : vector<1x8xf32>
    %48 = arith.subf %29, %47 : vector<1x8xf32>
    %49 = vector.broadcast %46 : vector<1x8xf32> to vector<128x8xf32>
    %50 = arith.mulf %27, %49 : vector<128x8xf32>
    %51 = vector.broadcast %48 : vector<1x8xf32> to vector<128x8xf32>
    %52 = arith.addf %50, %51 : vector<128x8xf32>
    %cst_15 = arith.constant 0.000000e+00 : f32
    %53 = vector.broadcast %cst_15 : f32 to vector<128x8xf32>
    %54 = arith.maximumf %52, %53 : vector<128x8xf32>
    %55 = vector.shape_cast %54 : vector<128x8xf32> to vector<2x8x8x8xf32>
    %c0_16 = arith.constant 0 : index
    %c0_17 = arith.constant 0 : index
    %56 = vector.load %arg4[%c0_16, %c0_17] : memref<72x128xf32, #tpu.memory_space<vmem>>, vector<72x128xf32>
    %cst_18 = arith.constant 0.000000e+00 : f32
    %57 = vector.broadcast %cst_18 : f32 to vector<2x8x1x8xf32>
    %58 = tpu.concatenate %57, %55, %57 in 2 : vector<2x8x1x8xf32>, vector<2x8x8x8xf32>, vector<2x8x1x8xf32> -> vector<2x8x10x8xf32>
    %cst_19 = arith.constant 0.000000e+00 : f32
    %59 = vector.broadcast %cst_19 : f32 to vector<2x1x10x8xf32>
    %60 = tpu.concatenate %59, %58, %59 in 1 : vector<2x1x10x8xf32>, vector<2x8x10x8xf32>, vector<2x1x10x8xf32> -> vector<2x10x10x8xf32>
    %61 = vector.extract_strided_slice %60 {offsets = [0, 0, 0, 0], sizes = [2, 8, 8, 8], strides = [1, 1, 1, 1]} : vector<2x10x10x8xf32> to vector<2x8x8x8xf32>
    %62 = vector.extract_strided_slice %60 {offsets = [0, 0, 1, 0], sizes = [2, 8, 8, 8], strides = [1, 1, 1, 1]} : vector<2x10x10x8xf32> to vector<2x8x8x8xf32>
    %63 = vector.extract_strided_slice %60 {offsets = [0, 0, 2, 0], sizes = [2, 8, 8, 8], strides = [1, 1, 1, 1]} : vector<2x10x10x8xf32> to vector<2x8x8x8xf32>
    %64 = vector.extract_strided_slice %60 {offsets = [0, 1, 0, 0], sizes = [2, 8, 8, 8], strides = [1, 1, 1, 1]} : vector<2x10x10x8xf32> to vector<2x8x8x8xf32>
    %65 = vector.extract_strided_slice %60 {offsets = [0, 1, 1, 0], sizes = [2, 8, 8, 8], strides = [1, 1, 1, 1]} : vector<2x10x10x8xf32> to vector<2x8x8x8xf32>
    %66 = vector.extract_strided_slice %60 {offsets = [0, 1, 2, 0], sizes = [2, 8, 8, 8], strides = [1, 1, 1, 1]} : vector<2x10x10x8xf32> to vector<2x8x8x8xf32>
    %67 = vector.extract_strided_slice %60 {offsets = [0, 2, 0, 0], sizes = [2, 8, 8, 8], strides = [1, 1, 1, 1]} : vector<2x10x10x8xf32> to vector<2x8x8x8xf32>
    %68 = vector.extract_strided_slice %60 {offsets = [0, 2, 1, 0], sizes = [2, 8, 8, 8], strides = [1, 1, 1, 1]} : vector<2x10x10x8xf32> to vector<2x8x8x8xf32>
    %69 = vector.extract_strided_slice %60 {offsets = [0, 2, 2, 0], sizes = [2, 8, 8, 8], strides = [1, 1, 1, 1]} : vector<2x10x10x8xf32> to vector<2x8x8x8xf32>
    %70 = tpu.concatenate %61, %62, %63, %64, %65, %66, %67, %68, %69 in 3 : vector<2x8x8x8xf32>, vector<2x8x8x8xf32>, vector<2x8x8x8xf32>, vector<2x8x8x8xf32>, vector<2x8x8x8xf32>, vector<2x8x8x8xf32>, vector<2x8x8x8xf32>, vector<2x8x8x8xf32>, vector<2x8x8x8xf32> -> vector<2x8x8x72xf32>
    %71 = vector.shape_cast %70 : vector<2x8x8x72xf32> to vector<128x72xf32>
    %cst_20 = arith.constant dense<0.000000e+00> : vector<128x128xf32>
    %72 = tpu.matmul %71, %56, %cst_20 {dimension_numbers = #tpu.dot_dimension_numbers<[1], [0], [0], [1], [0, 0, 1, 1], [], []>} : vector<128x72xf32>, vector<72x128xf32>, vector<128x128xf32> -> vector<128x128xf32>
    %c0_21 = arith.constant 0 : index
    %c0_22 = arith.constant 0 : index
    %73 = vector.load %arg5[%c0_21, %c0_22] : memref<1x128xf32, #tpu.memory_space<vmem>>, vector<1x128xf32>
    %c0_23 = arith.constant 0 : index
    %c0_24 = arith.constant 0 : index
    %74 = vector.load %arg6[%c0_23, %c0_24] : memref<1x128xf32, #tpu.memory_space<vmem>>, vector<1x128xf32>
    %cst_25 = arith.constant dense<0.000000e+00> : vector<128xf32>
    %75 = vector.multi_reduction <add>, %72, %cst_25 [0] : vector<128x128xf32> to vector<128xf32>
    %76 = vector.shape_cast %75 : vector<128xf32> to vector<1x128xf32>
    %cst_26 = arith.constant 1.280000e+02 : f32
    %77 = vector.broadcast %cst_26 : f32 to vector<1x128xf32>
    %78 = arith.divf %76, %77 : vector<1x128xf32>
    %79 = vector.broadcast %78 : vector<1x128xf32> to vector<128x128xf32>
    %80 = arith.subf %72, %79 : vector<128x128xf32>
    %81 = vector.broadcast %78 : vector<1x128xf32> to vector<128x128xf32>
    %82 = arith.subf %72, %81 : vector<128x128xf32>
    %83 = arith.mulf %80, %82 : vector<128x128xf32>
    %cst_27 = arith.constant dense<0.000000e+00> : vector<128xf32>
    %84 = vector.multi_reduction <add>, %83, %cst_27 [0] : vector<128x128xf32> to vector<128xf32>
    %85 = vector.shape_cast %84 : vector<128xf32> to vector<1x128xf32>
    %cst_28 = arith.constant 1.280000e+02 : f32
    %86 = vector.broadcast %cst_28 : f32 to vector<1x128xf32>
    %87 = arith.divf %85, %86 : vector<1x128xf32>
    %cst_29 = arith.constant 9.99999974E-6 : f32
    %88 = vector.broadcast %cst_29 : f32 to vector<1x128xf32>
    %89 = arith.addf %87, %88 : vector<1x128xf32>
    %90 = math.rsqrt %89 : vector<1x128xf32>
    %91 = arith.mulf %73, %90 : vector<1x128xf32>
    %92 = arith.mulf %78, %91 : vector<1x128xf32>
    %93 = arith.subf %74, %92 : vector<1x128xf32>
    %94 = vector.broadcast %91 : vector<1x128xf32> to vector<128x128xf32>
    %95 = arith.mulf %72, %94 : vector<128x128xf32>
    %96 = vector.broadcast %93 : vector<1x128xf32> to vector<128x128xf32>
    %97 = arith.addf %95, %96 : vector<128x128xf32>
    %cst_30 = arith.constant 0.000000e+00 : f32
    %98 = vector.broadcast %cst_30 : f32 to vector<128x128xf32>
    %99 = arith.maximumf %97, %98 : vector<128x128xf32>
    %100 = vector.shape_cast %99 : vector<128x128xf32> to vector<2x8x8x128xf32>
    %c0_31 = arith.constant 0 : index
    %c0_32 = arith.constant 0 : index
    %c0_33 = arith.constant 0 : index
    %c0_34 = arith.constant 0 : index
    %101 = vector.load %arg7[%c0_31, %c0_32, %c0_33, %c0_34] : memref<2x8x8x128xf32, #tpu.memory_space<vmem>>, vector<2x8x8x128xf32>
    tpu.vector_store %arg7[%c0_31, %c0_32, %c0_33, %c0_34], %100 {strides = array<i32>} : memref<2x8x8x128xf32, #tpu.memory_space<vmem>>, vector<2x8x8x128xf32>,
    return
  }
}

</mosaic_0001>

<llo_original>
// kernel: tpu_custom_call.1
$region0: #{tpu_custom_call.1}
  #allocation0 [shape = 'u32[]', space=smem, size = 0x4, offset = 0x4, fixed_abs, tag = 'smem constant byte address 0x4 - core index']
  #allocation1 [shape = 'u32[144,128]{1,0:T(1,128)}', space=vmem, size = 0x12000, scoped, tag = 'internal scratch']
  %s0 = inlined_call_operand.vmem [shape: f32[2,16,64], index: 0, kind: input, shape index: {}]
  %s1 = inlined_call_operand.vmem [shape: f32[36,8], index: 1, kind: input, shape index: {}]
  %s2 = inlined_call_operand.vmem [shape: f32[1,8], index: 2, kind: input, shape index: {}]
  %s3 = inlined_call_operand.vmem [shape: f32[1,8], index: 3, kind: input, shape index: {}]
  %s4 = inlined_call_operand.hbm [shape: f32[72,128], index: 4, kind: input, shape index: {}]
  %s5 = inlined_call_operand.vmem [shape: f32[1,128], index: 5, kind: input, shape index: {}]
  %s6 = inlined_call_operand.vmem [shape: f32[1,128], index: 6, kind: input, shape index: {}]
  %s7 = inlined_call_operand.hbm [shape: f32[2,8,8,128], index: 7, kind: output, shape index: {}]
  %s8 = sld [smem:[#allocation0]]
  $region42: #{tpu_custom_call.1} parent=0
    _
  %s10 = ssub.s32 1, %s8
  %s11 = scalar_select 0, %s10, %s8
  $region1: #{tpu_custom_call.1} parent=0
    #allocation2 [shape = 'u8[36864]{0}', space=vmem, size = 0x9000, scoped, tag = 'input window, operand 4, single buffered']
    #allocation3 [shape = 's32[1]{0}', space=sflag, size = 0x4, scoped, tag = 'scoped memory for tpu_custom_call.1']
    #allocation4 [shape = 's32[1]{0}', space=sflag, size = 0x4, scoped, tag = 'scoped memory for tpu_custom_call.1']
    #allocation5 [shape = 'u8[65536]{0}', space=vmem, size = 0x10000, scoped, tag = 'output window, operand 0, single buffered']
    %12 = vsyncpa [#allocation3], 0
    %13 = vsyncpa [#allocation4], 0
    // Predicated region
    $region2: #{tpu_custom_call.1} parent=1 // pred_check
      _
    $region3: #{tpu_custom_call.1} parent=1 // pred_check_branch
      %15 = sbr.rel (0) target = $region5
    $region4: #{tpu_custom_call.1} parent=1 // pred_region
      _
    $region5: #{tpu_custom_call.1} parent=1 // pred_fallthru
      _
    // Predicated region
    $region6: #{tpu_custom_call.1} parent=1 // pred_check
      _
    $region7: #{tpu_custom_call.1} parent=1 // pred_check_branch
      %17 = sbr.rel (0) target = $region9
    $region8: #{tpu_custom_call.1} parent=1 // pred_region
      _
    $region9: #{tpu_custom_call.1} parent=1 // pred_fallthru
      _
    // Predicated region
    $region10: #{tpu_custom_call.1} parent=1 // pred_check
      _
    $region11: #{tpu_custom_call.1} parent=1 // pred_check_branch
      %19 = sbr.rel (0) target = $region13
    $region12: #{tpu_custom_call.1} parent=1 // pred_region
      _
    $region13: #{tpu_custom_call.1} parent=1 // pred_fallthru
      _
    // Predicated region
    $region14: #{tpu_custom_call.1} parent=1 // pred_check
      _
    $region15: #{tpu_custom_call.1} parent=1 // pred_check_branch
      %21 = sbr.rel (0) target = $region17
    $region16: #{tpu_custom_call.1} parent=1 // pred_region
      _
    $region17: #{tpu_custom_call.1} parent=1 // pred_fallthru
      _
    // Predicated region
    $region18: #{tpu_custom_call.1} parent=1 // pred_check
      _
    $region19: #{tpu_custom_call.1} parent=1 // pred_check_branch
      %23 = sbr.rel (0) target = $region21
    $region20: #{tpu_custom_call.1} parent=1 // pred_region
      %s25 = ssub.s32 1152, 1152
      %26 = vsyncadd [#allocation3], %s25
      %s27 = sshll.u32 [#allocation2], 4
      %s28 = int_to_ptr.vmem [resolvable:$true] %s27
      %33 = dma.hbm_to_vmem [thread:$0]  %s4, 1152, %s28, [#allocation3], 128, 128, 8
    $region21: #{tpu_custom_call.1} parent=1 // pred_fallthru
      _
    // Predicated region
    $region22: #{tpu_custom_call.1} parent=1 // pred_check
      _
    $region23: #{tpu_custom_call.1} parent=1 // pred_check_branch
      %35 = sbr.rel (0) target = $region25
    $region24: #{tpu_custom_call.1} parent=1 // pred_region
      _
    $region25: #{tpu_custom_call.1} parent=1 // pred_fallthru
      _
    // Predicated region
    $region26: #{tpu_custom_call.1} parent=1 // pred_check
      _
    $region27: #{tpu_custom_call.1} parent=1 // pred_check_branch
      %37 = sbr.rel (0) target = $region29
    $region28: #{tpu_custom_call.1} parent=1 // pred_region
      _
    $region29: #{tpu_custom_call.1} parent=1 // pred_fallthru
      _
    // Predicated region
    $region30: #{tpu_custom_call.1} parent=1 // pred_check
      _
    $region31: #{tpu_custom_call.1} parent=1 // pred_check_branch
      %39 = sbr.rel (0) target = $region33
    $region32: #{tpu_custom_call.1} parent=1 // pred_region
      %40 = dma.done [#allocation3], 1152
    $region33: #{tpu_custom_call.1} parent=1 // pred_fallthru
      _
    %v41 = vld [vmem:[%s0] sm:$0xff]
    %v42 = vld [vmem:[%s0 + $0x8] sm:$0xff]
    %v43 = vld [vmem:[%s0 + $0x10] sm:$0xff]
    %v44 = vld [vmem:[%s0 + $0x18] sm:$0xff]
    %49 = vrot.lane.b32.xlu0 %v41, 120
    %v50 = vpop.permute.xlu0 %49
    %51 = vrot.lane.b32.xlu0 %v42, 120
    %v52 = vpop.permute.xlu0 %51
    %53 = vrot.lane.b32.xlu0 %v43, 120
    %v54 = vpop.permute.xlu0 %53
    %55 = vrot.lane.b32.xlu0 %v44, 120
    %v56 = vpop.permute.xlu0 %55
    %61 = vrot.lane.b32.xlu0 %v41, 112
    %v62 = vpop.permute.xlu0 %61
    %63 = vrot.lane.b32.xlu0 %v42, 112
    %v64 = vpop.permute.xlu0 %63
    %65 = vrot.lane.b32.xlu0 %v43, 112
    %v66 = vpop.permute.xlu0 %65
    %67 = vrot.lane.b32.xlu0 %v44, 112
    %v68 = vpop.permute.xlu0 %67
    %73 = vrot.lane.b32.xlu0 %v41, 104
    %v74 = vpop.permute.xlu0 %73
    %75 = vrot.lane.b32.xlu0 %v42, 104
    %v76 = vpop.permute.xlu0 %75
    %77 = vrot.lane.b32.xlu0 %v43, 104
    %v78 = vpop.permute.xlu0 %77
    %79 = vrot.lane.b32.xlu0 %v44, 104
    %v80 = vpop.permute.xlu0 %79
    %85 = vrot.lane.b32.xlu0 %v41, 96
    %v86 = vpop.permute.xlu0 %85
    %87 = vrot.lane.b32.xlu0 %v42, 96
    %v88 = vpop.permute.xlu0 %87
    %89 = vrot.lane.b32.xlu0 %v43, 96
    %v90 = vpop.permute.xlu0 %89
    %91 = vrot.lane.b32.xlu0 %v44, 96
    %v92 = vpop.permute.xlu0 %91
    %97 = vrot.lane.b32.xlu0 %v41, 88
    %v98 = vpop.permute.xlu0 %97
    %99 = vrot.lane.b32.xlu0 %v42, 88
    %v100 = vpop.permute.xlu0 %99
    %101 = vrot.lane.b32.xlu0 %v43, 88
    %v102 = vpop.permute.xlu0 %101
    %103 = vrot.lane.b32.xlu0 %v44, 88
    %v104 = vpop.permute.xlu0 %103
    %109 = vrot.lane.b32.xlu0 %v41, 80
    %v110 = vpop.permute.xlu0 %109
    %111 = vrot.lane.b32.xlu0 %v42, 80
    %v112 = vpop.permute.xlu0 %111
    %113 = vrot.lane.b32.xlu0 %v43, 80
    %v114 = vpop.permute.xlu0 %113
    %115 = vrot.lane.b32.xlu0 %v44, 80
    %v116 = vpop.permute.xlu0 %115
    %121 = vrot.lane.b32.xlu0 %v41, 72
    %v122 = vpop.permute.xlu0 %121
    %123 = vrot.lane.b32.xlu0 %v42, 72
    %v124 = vpop.permute.xlu0 %123
    %125 = vrot.lane.b32.xlu0 %v43, 72
    %v126 = vpop.permute.xlu0 %125
    %127 = vrot.lane.b32.xlu0 %v44, 72
    %v128 = vpop.permute.xlu0 %127
    %v133 = vcombine.low %v41, %v62
    %v134 = vcombine.high %v41, %v62
    %v136 = vunpack.c.l.s4 1983009808
    %v137 = vunpack.c.0.s8 %v136
    %v138 = vlaneseq
    %v139 = vshrl.u32 %v138, 7
    %v140 = vsub.s32 %v137, %v139
    %v141 = vrot.slane %v133, %v140
    %v143 = vunpack.c.l.s4 1983009808
    %v144 = vunpack.c.0.s8 %v143
    %v145 = vlaneseq
    %v146 = vshrl.u32 %v145, 7
    %v147 = vsub.s32 %v144, %v146
    %v148 = vrot.slane %v134, %v147
    %v149 = vcombine.low %v50, %v74
    %v150 = vcombine.high %v50, %v74
    %v152 = vunpack.c.l.s4 1983009808
    %v153 = vunpack.c.0.s8 %v152
    %v154 = vlaneseq
    %v155 = vshrl.u32 %v154, 7
    %v156 = vsub.s32 %v153, %v155
    %v157 = vrot.slane %v149, %v156
    %v159 = vunpack.c.l.s4 1983009808
    %v160 = vunpack.c.0.s8 %v159
    %v161 = vlaneseq
    %v162 = vshrl.u32 %v161, 7
    %v163 = vsub.s32 %v160, %v162
    %v164 = vrot.slane %v150, %v163
    %v165 = vcombine.low %v86, %v110
    %v166 = vcombine.high %v86, %v110
    %v168 = vunpack.c.l.s4 1983009808
    %v169 = vunpack.c.0.s8 %v168
    %v170 = vlaneseq
    %v171 = vshrl.u32 %v170, 7
    %v172 = vsub.s32 %v169, %v171
    %v173 = vrot.slane %v165, %v172
    %v175 = vunpack.c.l.s4 1983009808
    %v176 = vunpack.c.0.s8 %v175
    %v177 = vlaneseq
    %v178 = vshrl.u32 %v177, 7
    %v179 = vsub.s32 %v176, %v178
    %v180 = vrot.slane %v166, %v179
    %v181 = vcombine.low %v98, %v122
    %v182 = vcombine.high %v98, %v122
    %v184 = vunpack.c.l.s4 1983009808
    %v185 = vunpack.c.0.s8 %v184
    %v186 = vlaneseq
    %v187 = vshrl.u32 %v186, 7
    %v188 = vsub.s32 %v185, %v187
    %v189 = vrot.slane %v181, %v188
    %v191 = vunpack.c.l.s4 1983009808
    %v192 = vunpack.c.0.s8 %v191
    %v193 = vlaneseq
    %v194 = vshrl.u32 %v193, 7
    %v195 = vsub.s32 %v192, %v194
    %v196 = vrot.slane %v182, %v195
    %v197 = vcombine.low %v141, %v157
    %v198 = vcombine.high %v141, %v157
    %v200 = vunpack.c.l.s4 1934713408
    %v201 = vunpack.c.0.s8 %v200
    %v202 = vlaneseq
    %v203 = vshrl.u32 %v202, 7
    %v204 = vsub.s32 %v201, %v203
    %v205 = vrot.slane %v197, %v204
    %v207 = vunpack.c.l.s4 1934713408
    %v208 = vunpack.c.0.s8 %v207
    %v209 = vlaneseq
    %v210 = vshrl.u32 %v209, 7
    %v211 = vsub.s32 %v208, %v210
    %v212 = vrot.slane %v198, %v211
    %v213 = vcombine.low %v148, %v164
    %v214 = vcombine.high %v148, %v164
    %v216 = vunpack.c.l.s4 1934713408
    %v217 = vunpack.c.0.s8 %v216
    %v218 = vlaneseq
    %v219 = vshrl.u32 %v218, 7
    %v220 = vsub.s32 %v217, %v219
    %v221 = vrot.slane %v213, %v220
    %v223 = vunpack.c.l.s4 1934713408
    %v224 = vunpack.c.0.s8 %v223
    %v225 = vlaneseq
    %v226 = vshrl.u32 %v225, 7
    %v227 = vsub.s32 %v224, %v226
    %v228 = vrot.slane %v214, %v227
    %v229 = vcombine.low %v173, %v189
    %v230 = vcombine.high %v173, %v189
    %v232 = vunpack.c.l.s4 1934713408
    %v233 = vunpack.c.0.s8 %v232
    %v234 = vlaneseq
    %v235 = vshrl.u32 %v234, 7
    %v236 = vsub.s32 %v233, %v235
    %v237 = vrot.slane %v229, %v236
    %v239 = vunpack.c.l.s4 1934713408
    %v240 = vunpack.c.0.s8 %v239
    %v241 = vlaneseq
    %v242 = vshrl.u32 %v241, 7
    %v243 = vsub.s32 %v240, %v242
    %v244 = vrot.slane %v230, %v243
    %v245 = vcombine.low %v180, %v196
    %v246 = vcombine.high %v180, %v196
    %v248 = vunpack.c.l.s4 1934713408
    %v249 = vunpack.c.0.s8 %v248
    %v250 = vlaneseq
    %v251 = vshrl.u32 %v250, 7
    %v252 = vsub.s32 %v249, %v251
    %v253 = vrot.slane %v245, %v252
    %v255 = vunpack.c.l.s4 1934713408
    %v256 = vunpack.c.0.s8 %v255
    %v257 = vlaneseq
    %v258 = vshrl.u32 %v257, 7
    %v259 = vsub.s32 %v256, %v258
    %v260 = vrot.slane %v246, %v259
    %v261 = vcombine.low %v205, %v237
    %v262 = vcombine.high %v205, %v237
    %v263 = vcombine.low %v212, %v244
    %v264 = vcombine.high %v212, %v244
    %v265 = vcombine.low %v221, %v253
    %v266 = vcombine.high %v221, %v253
    %v267 = vcombine.low %v228, %v260
    %v268 = vcombine.high %v228, %v260
    %v269 = vcombine.low %v42, %v64
    %v270 = vcombine.high %v42, %v64
    %v272 = vunpack.c.l.s4 1983009808
    %v273 = vunpack.c.0.s8 %v272
    %v274 = vlaneseq
    %v275 = vshrl.u32 %v274, 7
    %v276 = vsub.s32 %v273, %v275
    %v277 = vrot.slane %v269, %v276
    %v279 = vunpack.c.l.s4 1983009808
    %v280 = vunpack.c.0.s8 %v279
    %v281 = vlaneseq
    %v282 = vshrl.u32 %v281, 7
    %v283 = vsub.s32 %v280, %v282
    %v284 = vrot.slane %v270, %v283
    %v285 = vcombine.low %v52, %v76
    %v286 = vcombine.high %v52, %v76
    %v288 = vunpack.c.l.s4 1983009808
    %v289 = vunpack.c.0.s8 %v288
    %v290 = vlaneseq
    %v291 = vshrl.u32 %v290, 7
    %v292 = vsub.s32 %v289, %v291
    %v293 = vrot.slane %v285, %v292
    %v295 = vunpack.c.l.s4 1983009808
    %v296 = vunpack.c.0.s8 %v295
    %v297 = vlaneseq
    %v298 = vshrl.u32 %v297, 7
    %v299 = vsub.s32 %v296, %v298
    %v300 = vrot.slane %v286, %v299
    %v301 = vcombine.low %v88, %v112
    %v302 = vcombine.high %v88, %v112
    %v304 = vunpack.c.l.s4 1983009808
    %v305 = vunpack.c.0.s8 %v304
    %v306 = vlaneseq
    %v307 = vshrl.u32 %v306, 7
    %v308 = vsub.s32 %v305, %v307
    %v309 = vrot.slane %v301, %v308
    %v311 = vunpack.c.l.s4 1983009808
    %v312 = vunpack.c.0.s8 %v311
    %v313 = vlaneseq
    %v314 = vshrl.u32 %v313, 7
    %v315 = vsub.s32 %v312, %v314
    %v316 = vrot.slane %v302, %v315
    %v317 = vcombine.low %v100, %v124
    %v318 = vcombine.high %v100, %v124
    %v320 = vunpack.c.l.s4 1983009808
    %v321 = vunpack.c.0.s8 %v320
    %v322 = vlaneseq
    %v323 = vshrl.u32 %v322, 7
    %v324 = vsub.s32 %v321, %v323
    %v325 = vrot.slane %v317, %v324
    %v327 = vunpack.c.l.s4 1983009808
    %v328 = vunpack.c.0.s8 %v327
    %v329 = vlaneseq
    %v330 = vshrl.u32 %v329, 7
    %v331 = vsub.s32 %v328, %v330
    %v332 = vrot.slane %v318, %v331
    %v333 = vcombine.low %v277, %v293
    %v334 = vcombine.high %v277, %v293
    %v336 = vunpack.c.l.s4 1934713408
    %v337 = vunpack.c.0.s8 %v336
    %v338 = vlaneseq
    %v339 = vshrl.u32 %v338, 7
    %v340 = vsub.s32 %v337, %v339
    %v341 = vrot.slane %v333, %v340
    %v343 = vunpack.c.l.s4 1934713408
    %v344 = vunpack.c.0.s8 %v343
    %v345 = vlaneseq
    %v346 = vshrl.u32 %v345, 7
    %v347 = vsub.s32 %v344, %v346
    %v348 = vrot.slane %v334, %v347
    %v349 = vcombine.low %v284, %v300
    %v350 = vcombine.high %v284, %v300
    %v352 = vunpack.c.l.s4 1934713408
    %v353 = vunpack.c.0.s8 %v352
    %v354 = vlaneseq
    %v355 = vshrl.u32 %v354, 7
    %v356 = vsub.s32 %v353, %v355
    %v357 = vrot.slane %v349, %v356
    %v359 = vunpack.c.l.s4 1934713408
    %v360 = vunpack.c.0.s8 %v359
    %v361 = vlaneseq
    %v362 = vshrl.u32 %v361, 7
    %v363 = vsub.s32 %v360, %v362
    %v364 = vrot.slane %v350, %v363
    %v365 = vcombine.low %v309, %v325
    %v366 = vcombine.high %v309, %v325
    %v368 = vunpack.c.l.s4 1934713408
    %v369 = vunpack.c.0.s8 %v368
    %v370 = vlaneseq
    %v371 = vshrl.u32 %v370, 7
    %v372 = vsub.s32 %v369, %v371
    %v373 = vrot.slane %v365, %v372
    %v375 = vunpack.c.l.s4 1934713408
    %v376 = vunpack.c.0.s8 %v375
    %v377 = vlaneseq
    %v378 = vshrl.u32 %v377, 7
    %v379 = vsub.s32 %v376, %v378
    %v380 = vrot.slane %v366, %v379
    %v381 = vcombine.low %v316, %v332
    %v382 = vcombine.high %v316, %v332
    %v384 = vunpack.c.l.s4 1934713408
    %v385 = vunpack.c.0.s8 %v384
    %v386 = vlaneseq
    %v387 = vshrl.u32 %v386, 7
    %v388 = vsub.s32 %v385, %v387
    %v389 = vrot.slane %v381, %v388
    %v391 = vunpack.c.l.s4 1934713408
    %v392 = vunpack.c.0.s8 %v391
    %v393 = vlaneseq
    %v394 = vshrl.u32 %v393, 7
    %v395 = vsub.s32 %v392, %v394
    %v396 = vrot.slane %v382, %v395
    %v397 = vcombine.low %v341, %v373
    %v398 = vcombine.high %v341, %v373
    %v399 = vcombine.low %v348, %v380
    %v400 = vcombine.high %v348, %v380
    %v401 = vcombine.low %v357, %v389
    %v402 = vcombine.high %v357, %v389
    %v403 = vcombine.low %v364, %v396
    %v404 = vcombine.high %v364, %v396
    %v405 = vcombine.low %v43, %v66
    %v406 = vcombine.high %v43, %v66
    %v408 = vunpack.c.l.s4 1983009808
    %v409 = vunpack.c.0.s8 %v408
    %v410 = vlaneseq
    %v411 = vshrl.u32 %v410, 7
    %v412 = vsub.s32 %v409, %v411
    %v413 = vrot.slane %v405, %v412
    %v415 = vunpack.c.l.s4 1983009808
    %v416 = vunpack.c.0.s8 %v415
    %v417 = vlaneseq
    %v418 = vshrl.u32 %v417, 7
    %v419 = vsub.s32 %v416, %v418
    %v420 = vrot.slane %v406, %v419
    %v421 = vcombine.low %v54, %v78
    %v422 = vcombine.high %v54, %v78
    %v424 = vunpack.c.l.s4 1983009808
    %v425 = vunpack.c.0.s8 %v424
    %v426 = vlaneseq
    %v427 = vshrl.u32 %v426, 7
    %v428 = vsub.s32 %v425, %v427
    %v429 = vrot.slane %v421, %v428
    %v431 = vunpack.c.l.s4 1983009808
    %v432 = vunpack.c.0.s8 %v431
    %v433 = vlaneseq
    %v434 = vshrl.u32 %v433, 7
    %v435 = vsub.s32 %v432, %v434
    %v436 = vrot.slane %v422, %v435
    %v437 = vcombine.low %v90, %v114
    %v438 = vcombine.high %v90, %v114
    %v440 = vunpack.c.l.s4 1983009808
    %v441 = vunpack.c.0.s8 %v440
    %v442 = vlaneseq
    %v443 = vshrl.u32 %v442, 7
    %v444 = vsub.s32 %v441, %v443
    %v445 = vrot.slane %v437, %v444
    %v447 = vunpack.c.l.s4 1983009808
    %v448 = vunpack.c.0.s8 %v447
    %v449 = vlaneseq
    %v450 = vshrl.u32 %v449, 7
    %v451 = vsub.s32 %v448, %v450
    %v452 = vrot.slane %v438, %v451
    %v453 = vcombine.low %v102, %v126
    %v454 = vcombine.high %v102, %v126
    %v456 = vunpack.c.l.s4 1983009808
    %v457 = vunpack.c.0.s8 %v456
    %v458 = vlaneseq
    %v459 = vshrl.u32 %v458, 7
    %v460 = vsub.s32 %v457, %v459
    %v461 = vrot.slane %v453, %v460
    %v463 = vunpack.c.l.s4 1983009808
    %v464 = vunpack.c.0.s8 %v463
    %v465 = vlaneseq
    %v466 = vshrl.u32 %v465, 7
    %v467 = vsub.s32 %v464, %v466
    %v468 = vrot.slane %v454, %v467
    %v469 = vcombine.low %v413, %v429
    %v470 = vcombine.high %v413, %v429
    %v472 = vunpack.c.l.s4 1934713408
    %v473 = vunpack.c.0.s8 %v472
    %v474 = vlaneseq
    %v475 = vshrl.u32 %v474, 7
    %v476 = vsub.s32 %v473, %v475
    %v477 = vrot.slane %v469, %v476
    %v479 = vunpack.c.l.s4 1934713408
    %v480 = vunpack.c.0.s8 %v479
    %v481 = vlaneseq
    %v482 = vshrl.u32 %v481, 7
    %v483 = vsub.s32 %v480, %v482
    %v484 = vrot.slane %v470, %v483
    %v485 = vcombine.low %v420, %v436
    %v486 = vcombine.high %v420, %v436
    %v488 = vunpack.c.l.s4 1934713408
    %v489 = vunpack.c.0.s8 %v488
    %v490 = vlaneseq
    %v491 = vshrl.u32 %v490, 7
    %v492 = vsub.s32 %v489, %v491
    %v493 = vrot.slane %v485, %v492
    %v495 = vunpack.c.l.s4 1934713408
    %v496 = vunpack.c.0.s8 %v495
    %v497 = vlaneseq
    %v498 = vshrl.u32 %v497, 7
    %v499 = vsub.s32 %v496, %v498
    %v500 = vrot.slane %v486, %v499
    %v501 = vcombine.low %v445, %v461
    %v502 = vcombine.high %v445, %v461
    %v504 = vunpack.c.l.s4 1934713408
    %v505 = vunpack.c.0.s8 %v504
    %v506 = vlaneseq
    %v507 = vshrl.u32 %v506, 7
    %v508 = vsub.s32 %v505, %v507
    %v509 = vrot.slane %v501, %v508
    %v511 = vunpack.c.l.s4 1934713408
    %v512 = vunpack.c.0.s8 %v511
    %v513 = vlaneseq
    %v514 = vshrl.u32 %v513, 7
    %v515 = vsub.s32 %v512, %v514
    %v516 = vrot.slane %v502, %v515
    %v517 = vcombine.low %v452, %v468
    %v518 = vcombine.high %v452, %v468
    %v520 = vunpack.c.l.s4 1934713408
    %v521 = vunpack.c.0.s8 %v520
    %v522 = vlaneseq
    %v523 = vshrl.u32 %v522, 7
    %v524 = vsub.s32 %v521, %v523
    %v525 = vrot.slane %v517, %v524
    %v527 = vunpack.c.l.s4 1934713408
    %v528 = vunpack.c.0.s8 %v527
    %v529 = vlaneseq
    %v530 = vshrl.u32 %v529, 7
    %v531 = vsub.s32 %v528, %v530
    %v532 = vrot.slane %v518, %v531
    %v533 = vcombine.low %v477, %v509
    %v534 = vcombine.high %v477, %v509
    %v535 = vcombine.low %v484, %v516
    %v536 = vcombine.high %v484, %v516
    %v537 = vcombine.low %v493, %v525
    %v538 = vcombine.high %v493, %v525
    %v539 = vcombine.low %v500, %v532
    %v540 = vcombine.high %v500, %v532
    %v541 = vcombine.low %v44, %v68
    %v542 = vcombine.high %v44, %v68
    %v544 = vunpack.c.l.s4 1983009808
    %v545 = vunpack.c.0.s8 %v544
    %v546 = vlaneseq
    %v547 = vshrl.u32 %v546, 7
    %v548 = vsub.s32 %v545, %v547
    %v549 = vrot.slane %v541, %v548
    %v551 = vunpack.c.l.s4 1983009808
    %v552 = vunpack.c.0.s8 %v551
    %v553 = vlaneseq
    %v554 = vshrl.u32 %v553, 7
    %v555 = vsub.s32 %v552, %v554
    %v556 = vrot.slane %v542, %v555
    %v557 = vcombine.low %v56, %v80
    %v558 = vcombine.high %v56, %v80
    %v560 = vunpack.c.l.s4 1983009808
    %v561 = vunpack.c.0.s8 %v560
    %v562 = vlaneseq
    %v563 = vshrl.u32 %v562, 7
    %v564 = vsub.s32 %v561, %v563
    %v565 = vrot.slane %v557, %v564
    %v567 = vunpack.c.l.s4 1983009808
    %v568 = vunpack.c.0.s8 %v567
    %v569 = vlaneseq
    %v570 = vshrl.u32 %v569, 7
    %v571 = vsub.s32 %v568, %v570
    %v572 = vrot.slane %v558, %v571
    %v573 = vcombine.low %v92, %v116
    %v574 = vcombine.high %v92, %v116
    %v576 = vunpack.c.l.s4 1983009808
    %v577 = vunpack.c.0.s8 %v576
    %v578 = vlaneseq
    %v579 = vshrl.u32 %v578, 7
    %v580 = vsub.s32 %v577, %v579
    %v581 = vrot.slane %v573, %v580
    %v583 = vunpack.c.l.s4 1983009808
    %v584 = vunpack.c.0.s8 %v583
    %v585 = vlaneseq
    %v586 = vshrl.u32 %v585, 7
    %v587 = vsub.s32 %v584, %v586
    %v588 = vrot.slane %v574, %v587
    %v589 = vcombine.low %v104, %v128
    %v590 = vcombine.high %v104, %v128
    %v592 = vunpack.c.l.s4 1983009808
    %v593 = vunpack.c.0.s8 %v592
    %v594 = vlaneseq
    %v595 = vshrl.u32 %v594, 7
    %v596 = vsub.s32 %v593, %v595
    %v597 = vrot.slane %v589, %v596
    %v599 = vunpack.c.l.s4 1983009808
    %v600 = vunpack.c.0.s8 %v599
    %v601 = vlaneseq
    %v602 = vshrl.u32 %v601, 7
    %v603 = vsub.s32 %v600, %v602
    %v604 = vrot.slane %v590, %v603
    %v605 = vcombine.low %v549, %v565
    %v606 = vcombine.high %v549, %v565
    %v608 = vunpack.c.l.s4 1934713408
    %v609 = vunpack.c.0.s8 %v608
    %v610 = vlaneseq
    %v611 = vshrl.u32 %v610, 7
    %v612 = vsub.s32 %v609, %v611
    %v613 = vrot.slane %v605, %v612
    %v615 = vunpack.c.l.s4 1934713408
    %v616 = vunpack.c.0.s8 %v615
    %v617 = vlaneseq
    %v618 = vshrl.u32 %v617, 7
    %v619 = vsub.s32 %v616, %v618
    %v620 = vrot.slane %v606, %v619
    %v621 = vcombine.low %v556, %v572
    %v622 = vcombine.high %v556, %v572
    %v624 = vunpack.c.l.s4 1934713408
    %v625 = vunpack.c.0.s8 %v624
    %v626 = vlaneseq
    %v627 = vshrl.u32 %v626, 7
    %v628 = vsub.s32 %v625, %v627
    %v629 = vrot.slane %v621, %v628
    %v631 = vunpack.c.l.s4 1934713408
    %v632 = vunpack.c.0.s8 %v631
    %v633 = vlaneseq
    %v634 = vshrl.u32 %v633, 7
    %v635 = vsub.s32 %v632, %v634
    %v636 = vrot.slane %v622, %v635
    %v637 = vcombine.low %v581, %v597
    %v638 = vcombine.high %v581, %v597
    %v640 = vunpack.c.l.s4 1934713408
    %v641 = vunpack.c.0.s8 %v640
    %v642 = vlaneseq
    %v643 = vshrl.u32 %v642, 7
    %v644 = vsub.s32 %v641, %v643
    %v645 = vrot.slane %v637, %v644
    %v647 = vunpack.c.l.s4 1934713408
    %v648 = vunpack.c.0.s8 %v647
    %v649 = vlaneseq
    %v650 = vshrl.u32 %v649, 7
    %v651 = vsub.s32 %v648, %v650
    %v652 = vrot.slane %v638, %v651
    %v653 = vcombine.low %v588, %v604
    %v654 = vcombine.high %v588, %v604
    %v656 = vunpack.c.l.s4 1934713408
    %v657 = vunpack.c.0.s8 %v656
    %v658 = vlaneseq
    %v659 = vshrl.u32 %v658, 7
    %v660 = vsub.s32 %v657, %v659
    %v661 = vrot.slane %v653, %v660
    %v663 = vunpack.c.l.s4 1934713408
    %v664 = vunpack.c.0.s8 %v663
    %v665 = vlaneseq
    %v666 = vshrl.u32 %v665, 7
    %v667 = vsub.s32 %v664, %v666
    %v668 = vrot.slane %v654, %v667
    %v669 = vcombine.low %v613, %v645
    %v670 = vcombine.high %v613, %v645
    %v671 = vcombine.low %v620, %v652
    %v672 = vcombine.high %v620, %v652
    %v673 = vcombine.low %v629, %v661
    %v674 = vcombine.high %v629, %v661
    %v675 = vcombine.low %v636, %v668
    %v676 = vcombine.high %v636, %v668
    %709 = vrot.lane.b32.xlu0 %v261, 124
    %v710 = vpop.permute.xlu0 %709
    %711 = vrot.lane.b32.xlu0 %v262, 124
    %v712 = vpop.permute.xlu0 %711
    %713 = vrot.lane.b32.xlu0 %v263, 124
    %v714 = vpop.permute.xlu0 %713
    %715 = vrot.lane.b32.xlu0 %v264, 124
    %v716 = vpop.permute.xlu0 %715
    %717 = vrot.lane.b32.xlu0 %v265, 124
    %v718 = vpop.permute.xlu0 %717
    %719 = vrot.lane.b32.xlu0 %v266, 124
    %v720 = vpop.permute.xlu0 %719
    %721 = vrot.lane.b32.xlu0 %v267, 124
    %v722 = vpop.permute.xlu0 %721
    %723 = vrot.lane.b32.xlu0 %v268, 124
    %v724 = vpop.permute.xlu0 %723
    %725 = vrot.lane.b32.xlu0 %v397, 124
    %v726 = vpop.permute.xlu0 %725
    %727 = vrot.lane.b32.xlu0 %v398, 124
    %v728 = vpop.permute.xlu0 %727
    %729 = vrot.lane.b32.xlu0 %v399, 124
    %v730 = vpop.permute.xlu0 %729
    %731 = vrot.lane.b32.xlu0 %v400, 124
    %v732 = vpop.permute.xlu0 %731
    %733 = vrot.lane.b32.xlu0 %v401, 124
    %v734 = vpop.permute.xlu0 %733
    %735 = vrot.lane.b32.xlu0 %v402, 124
    %v736 = vpop.permute.xlu0 %735
    %737 = vrot.lane.b32.xlu0 %v403, 124
    %v738 = vpop.permute.xlu0 %737
    %739 = vrot.lane.b32.xlu0 %v404, 124
    %v740 = vpop.permute.xlu0 %739
    %741 = vrot.lane.b32.xlu0 %v533, 124
    %v742 = vpop.permute.xlu0 %741
    %743 = vrot.lane.b32.xlu0 %v534, 124
    %v744 = vpop.permute.xlu0 %743
    %745 = vrot.lane.b32.xlu0 %v535, 124
    %v746 = vpop.permute.xlu0 %745
    %747 = vrot.lane.b32.xlu0 %v536, 124
    %v748 = vpop.permute.xlu0 %747
    %749 = vrot.lane.b32.xlu0 %v537, 124
    %v750 = vpop.permute.xlu0 %749
    %751 = vrot.lane.b32.xlu0 %v538, 124
    %v752 = vpop.permute.xlu0 %751
    %753 = vrot.lane.b32.xlu0 %v539, 124
    %v754 = vpop.permute.xlu0 %753
    %755 = vrot.lane.b32.xlu0 %v540, 124
    %v756 = vpop.permute.xlu0 %755
    %757 = vrot.lane.b32.xlu0 %v669, 124
    %v758 = vpop.permute.xlu0 %757
    %759 = vrot.lane.b32.xlu0 %v670, 124
    %v760 = vpop.permute.xlu0 %759
    %761 = vrot.lane.b32.xlu0 %v671, 124
    %v762 = vpop.permute.xlu0 %761
    %763 = vrot.lane.b32.xlu0 %v672, 124
    %v764 = vpop.permute.xlu0 %763
    %765 = vrot.lane.b32.xlu0 %v673, 124
    %v766 = vpop.permute.xlu0 %765
    %767 = vrot.lane.b32.xlu0 %v674, 124
    %v768 = vpop.permute.xlu0 %767
    %769 = vrot.lane.b32.xlu0 %v675, 124
    %v770 = vpop.permute.xlu0 %769
    %771 = vrot.lane.b32.xlu0 %v676, 124
    %v772 = vpop.permute.xlu0 %771
    %v805 = vmax.f32 %v261, %v710
    %v806 = vmax.f32 %v262, %v712
    %v807 = vmax.f32 %v263, %v714
    %v808 = vmax.f32 %v264, %v716
    %v809 = vmax.f32 %v265, %v718
    %v810 = vmax.f32 %v266, %v720
    %v811 = vmax.f32 %v267, %v722
    %v812 = vmax.f32 %v268, %v724
    %v813 = vmax.f32 %v397, %v726
    %v814 = vmax.f32 %v398, %v728
    %v815 = vmax.f32 %v399, %v730
    %v816 = vmax.f32 %v400, %v732
    %v817 = vmax.f32 %v401, %v734
    %v818 = vmax.f32 %v402, %v736
    %v819 = vmax.f32 %v403, %v738
    %v820 = vmax.f32 %v404, %v740
    %v821 = vmax.f32 %v533, %v742
    %v822 = vmax.f32 %v534, %v744
    %v823 = vmax.f32 %v535, %v746
    %v824 = vmax.f32 %v536, %v748
    %v825 = vmax.f32 %v537, %v750
    %v826 = vmax.f32 %v538, %v752
    %v827 = vmax.f32 %v539, %v754
    %v828 = vmax.f32 %v540, %v756
    %v829 = vmax.f32 %v669, %v758
    %v830 = vmax.f32 %v670, %v760
    %v831 = vmax.f32 %v671, %v762
    %v832 = vmax.f32 %v672, %v764
    %v833 = vmax.f32 %v673, %v766
    %v834 = vmax.f32 %v674, %v768
    %v835 = vmax.f32 %v675, %v770
    %v836 = vmax.f32 %v676, %v772
    %v837 = vmax.f32 %v805, %v806
    %v838 = vmax.f32 %v807, %v808
    %v839 = vmax.f32 %v809, %v810
    %v840 = vmax.f32 %v811, %v812
    %v841 = vmax.f32 %v813, %v814
    %v842 = vmax.f32 %v815, %v816
    %v843 = vmax.f32 %v817, %v818
    %v844 = vmax.f32 %v819, %v820
    %v845 = vmax.f32 %v821, %v822
    %v846 = vmax.f32 %v823, %v824
    %v847 = vmax.f32 %v825, %v826
    %v848 = vmax.f32 %v827, %v828
    %v849 = vmax.f32 %v829, %v830
    %v850 = vmax.f32 %v831, %v832
    %v851 = vmax.f32 %v833, %v834
    %v852 = vmax.f32 %v835, %v836
    %v853 = vld [vmem:[%s1] sm:$0xff]
    %v854 = vld [vmem:[%s1 + $0x8] sm:$0xff]
    %v855 = vld [vmem:[%s1 + $0x10] sm:$0xff]
    %v856 = vld [vmem:[%s1 + $0x18] sm:$0xff]
    %v857 = vld [vmem:[%s1 + $0x20] sm:$0xf]
    %v874 = vrot.slane %v837, 7
    %v875 = vrot.slane %v838, 7
    %v876 = vrot.slane %v839, 7
    %v877 = vrot.slane %v840, 7
    %v878 = vrot.slane %v841, 7
    %v879 = vrot.slane %v842, 7
    %v880 = vrot.slane %v843, 7
    %v881 = vrot.slane %v844, 7
    %v882 = vrot.slane %v845, 7
    %v883 = vrot.slane %v846, 7
    %v884 = vrot.slane %v847, 7
    %v885 = vrot.slane %v848, 7
    %v886 = vrot.slane %v849, 7
    %v887 = vrot.slane %v850, 7
    %v888 = vrot.slane %v851, 7
    %v889 = vrot.slane %v852, 7
    %vm906 = vcmask 1040384
    %v907 = vsel %vm906, 0.0, %v874
    %v908 = vsel %vm906, 0.0, %v875
    %v909 = vsel %vm906, 0.0, %v876
    %v910 = vsel %vm906, 0.0, %v877
    %v911 = vsel %vm906, 0.0, %v878
    %v912 = vsel %vm906, 0.0, %v879
    %v913 = vsel %vm906, 0.0, %v880
    %v914 = vsel %vm906, 0.0, %v881
    %v915 = vsel %vm906, 0.0, %v882
    %v916 = vsel %vm906, 0.0, %v883
    %v917 = vsel %vm906, 0.0, %v884
    %v918 = vsel %vm906, 0.0, %v885
    %v919 = vsel %vm906, 0.0, %v886
    %v920 = vsel %vm906, 0.0, %v887
    %v921 = vsel %vm906, 0.0, %v888
    %v922 = vsel %vm906, 0.0, %v889
    %v923 = vsel %vm906, %v874, 0.0
    %v924 = vsel %vm906, %v875, 0.0
    %v925 = vsel %vm906, %v876, 0.0
    %v926 = vsel %vm906, %v877, 0.0
    %v927 = vsel %vm906, %v878, 0.0
    %v928 = vsel %vm906, %v879, 0.0
    %v929 = vsel %vm906, %v880, 0.0
    %v930 = vsel %vm906, %v881, 0.0
    %v931 = vsel %vm906, %v882, 0.0
    %v932 = vsel %vm906, %v883, 0.0
    %v933 = vsel %vm906, %v884, 0.0
    %v934 = vsel %vm906, %v885, 0.0
    %v935 = vsel %vm906, %v886, 0.0
    %v936 = vsel %vm906, %v887, 0.0
    %v937 = vsel %vm906, %v888, 0.0
    %v938 = vsel %vm906, %v889, 0.0
    %vm968 = vcmask 1046528
    %v969 = vrot.slane 0.0, 1
    %v970 = vsel %vm968, %v969, %v969
    %v971 = vrot.slane %v907, 1
    %v972 = vrot.slane %v923, 1
    %v973 = vsel %vm968, %v971, %v972
    %v974 = vrot.slane %v908, 1
    %v975 = vrot.slane %v924, 1
    %v976 = vsel %vm968, %v974, %v975
    %v977 = vrot.slane %v909, 1
    %v978 = vrot.slane %v925, 1
    %v979 = vsel %vm968, %v977, %v978
    %v980 = vrot.slane %v910, 1
    %v981 = vrot.slane %v926, 1
    %v982 = vsel %vm968, %v980, %v981
    %v983 = vrot.slane %v911, 1
    %v984 = vrot.slane %v927, 1
    %v985 = vsel %vm968, %v983, %v984
    %v986 = vrot.slane %v912, 1
    %v987 = vrot.slane %v928, 1
    %v988 = vsel %vm968, %v986, %v987
    %v989 = vrot.slane %v913, 1
    %v990 = vrot.slane %v929, 1
    %v991 = vsel %vm968, %v989, %v990
    %v992 = vrot.slane %v915, 1
    %v993 = vrot.slane %v931, 1
    %v994 = vsel %vm968, %v992, %v993
    %v995 = vrot.slane %v916, 1
    %v996 = vrot.slane %v932, 1
    %v997 = vsel %vm968, %v995, %v996
    %v998 = vrot.slane %v917, 1
    %v999 = vrot.slane %v933, 1
    %v1000 = vsel %vm968, %v998, %v999
    %v1001 = vrot.slane %v918, 1
    %v1002 = vrot.slane %v934, 1
    %v1003 = vsel %vm968, %v1001, %v1002
    %v1004 = vrot.slane %v919, 1
    %v1005 = vrot.slane %v935, 1
    %v1006 = vsel %vm968, %v1004, %v1005
    %v1007 = vrot.slane %v920, 1
    %v1008 = vrot.slane %v936, 1
    %v1009 = vsel %vm968, %v1007, %v1008
    %v1010 = vrot.slane %v921, 1
    %v1011 = vrot.slane %v937, 1
    %v1012 = vsel %vm968, %v1010, %v1011
    %1013 = vrot.lane.b32.xlu0 %v970, 4
    %v1014 = vpop.permute.xlu0 %1013
    %1015 = vrot.lane.b32.xlu0 %v973, 4
    %v1016 = vpop.permute.xlu0 %1015
    %1017 = vrot.lane.b32.xlu0 %v976, 4
    %v1018 = vpop.permute.xlu0 %1017
    %1019 = vrot.lane.b32.xlu0 %v979, 4
    %v1020 = vpop.permute.xlu0 %1019
    %1021 = vrot.lane.b32.xlu0 %v982, 4
    %v1022 = vpop.permute.xlu0 %1021
    %1023 = vrot.lane.b32.xlu0 %v985, 4
    %v1024 = vpop.permute.xlu0 %1023
    %1025 = vrot.lane.b32.xlu0 %v988, 4
    %v1026 = vpop.permute.xlu0 %1025
    %1027 = vrot.lane.b32.xlu0 %v991, 4
    %v1028 = vpop.permute.xlu0 %1027
    %1029 = vrot.lane.b32.xlu0 %v994, 4
    %v1030 = vpop.permute.xlu0 %1029
    %1031 = vrot.lane.b32.xlu0 %v997, 4
    %v1032 = vpop.permute.xlu0 %1031
    %1033 = vrot.lane.b32.xlu0 %v1000, 4
    %v1034 = vpop.permute.xlu0 %1033
    %1035 = vrot.lane.b32.xlu0 %v1003, 4
    %v1036 = vpop.permute.xlu0 %1035
    %1037 = vrot.lane.b32.xlu0 %v1006, 4
    %v1038 = vpop.permute.xlu0 %1037
    %1039 = vrot.lane.b32.xlu0 %v1009, 4
    %v1040 = vpop.permute.xlu0 %1039
    %1041 = vrot.lane.b32.xlu0 %v1012, 4
    %v1042 = vpop.permute.xlu0 %1041
    %vm1058 = vcmask 1045504
    %v1059 = vrot.slane 0.0, 2
    %v1060 = vsel %vm1058, %v1059, %v1059
    %v1061 = vrot.slane %v907, 2
    %v1062 = vrot.slane %v923, 2
    %v1063 = vsel %vm1058, %v1061, %v1062
    %v1064 = vrot.slane %v908, 2
    %v1065 = vrot.slane %v924, 2
    %v1066 = vsel %vm1058, %v1064, %v1065
    %v1067 = vrot.slane %v909, 2
    %v1068 = vrot.slane %v925, 2
    %v1069 = vsel %vm1058, %v1067, %v1068
    %v1070 = vrot.slane %v910, 2
    %v1071 = vrot.slane %v926, 2
    %v1072 = vsel %vm1058, %v1070, %v1071
    %v1073 = vrot.slane %v911, 2
    %v1074 = vrot.slane %v927, 2
    %v1075 = vsel %vm1058, %v1073, %v1074
    %v1076 = vrot.slane %v912, 2
    %v1077 = vrot.slane %v928, 2
    %v1078 = vsel %vm1058, %v1076, %v1077
    %v1079 = vrot.slane %v913, 2
    %v1080 = vrot.slane %v929, 2
    %v1081 = vsel %vm1058, %v1079, %v1080
    %v1082 = vrot.slane %v915, 2
    %v1083 = vrot.slane %v931, 2
    %v1084 = vsel %vm1058, %v1082, %v1083
    %v1085 = vrot.slane %v916, 2
    %v1086 = vrot.slane %v932, 2
    %v1087 = vsel %vm1058, %v1085, %v1086
    %v1088 = vrot.slane %v917, 2
    %v1089 = vrot.slane %v933, 2
    %v1090 = vsel %vm1058, %v1088, %v1089
    %v1091 = vrot.slane %v918, 2
    %v1092 = vrot.slane %v934, 2
    %v1093 = vsel %vm1058, %v1091, %v1092
    %v1094 = vrot.slane %v919, 2
    %v1095 = vrot.slane %v935, 2
    %v1096 = vsel %vm1058, %v1094, %v1095
    %v1097 = vrot.slane %v920, 2
    %v1098 = vrot.slane %v936, 2
    %v1099 = vsel %vm1058, %v1097, %v1098
    %v1100 = vrot.slane %v921, 2
    %v1101 = vrot.slane %v937, 2
    %v1102 = vsel %vm1058, %v1100, %v1101
    %1103 = vrot.lane.b32.xlu0 %v1060, 8
    %v1104 = vpop.permute.xlu0 %1103
    %1105 = vrot.lane.b32.xlu0 %v1063, 8
    %v1106 = vpop.permute.xlu0 %1105
    %1107 = vrot.lane.b32.xlu0 %v1066, 8
    %v1108 = vpop.permute.xlu0 %1107
    %1109 = vrot.lane.b32.xlu0 %v1069, 8
    %v1110 = vpop.permute.xlu0 %1109
    %1111 = vrot.lane.b32.xlu0 %v1072, 8
    %v1112 = vpop.permute.xlu0 %1111
    %1113 = vrot.lane.b32.xlu0 %v1075, 8
    %v1114 = vpop.permute.xlu0 %1113
    %1115 = vrot.lane.b32.xlu0 %v1078, 8
    %v1116 = vpop.permute.xlu0 %1115
    %1117 = vrot.lane.b32.xlu0 %v1081, 8
    %v1118 = vpop.permute.xlu0 %1117
    %1119 = vrot.lane.b32.xlu0 %v1084, 8
    %v1120 = vpop.permute.xlu0 %1119
    %1121 = vrot.lane.b32.xlu0 %v1087, 8
    %v1122 = vpop.permute.xlu0 %1121
    %1123 = vrot.lane.b32.xlu0 %v1090, 8
    %v1124 = vpop.permute.xlu0 %1123
    %1125 = vrot.lane.b32.xlu0 %v1093, 8
    %v1126 = vpop.permute.xlu0 %1125
    %1127 = vrot.lane.b32.xlu0 %v1096, 8
    %v1128 = vpop.permute.xlu0 %1127
    %1129 = vrot.lane.b32.xlu0 %v1099, 8
    %v1130 = vpop.permute.xlu0 %1129
    %1131 = vrot.lane.b32.xlu0 %v1102, 8
    %v1132 = vpop.permute.xlu0 %1131
    %1150 = vrot.lane.b32.xlu0 %v907, 12
    %v1151 = vpop.permute.xlu0 %1150
    %1152 = vrot.lane.b32.xlu0 %v908, 12
    %v1153 = vpop.permute.xlu0 %1152
    %1154 = vrot.lane.b32.xlu0 %v909, 12
    %v1155 = vpop.permute.xlu0 %1154
    %1156 = vrot.lane.b32.xlu0 %v910, 12
    %v1157 = vpop.permute.xlu0 %1156
    %1158 = vrot.lane.b32.xlu0 %v911, 12
    %v1159 = vpop.permute.xlu0 %1158
    %1160 = vrot.lane.b32.xlu0 %v912, 12
    %v1161 = vpop.permute.xlu0 %1160
    %1162 = vrot.lane.b32.xlu0 %v913, 12
    %v1163 = vpop.permute.xlu0 %1162
    %1164 = vrot.lane.b32.xlu0 %v914, 12
    %v1165 = vpop.permute.xlu0 %1164
    %1166 = vrot.lane.b32.xlu0 %v915, 12
    %v1167 = vpop.permute.xlu0 %1166
    %1168 = vrot.lane.b32.xlu0 %v916, 12
    %v1169 = vpop.permute.xlu0 %1168
    %1170 = vrot.lane.b32.xlu0 %v917, 12
    %v1171 = vpop.permute.xlu0 %1170
    %1172 = vrot.lane.b32.xlu0 %v918, 12
    %v1173 = vpop.permute.xlu0 %1172
    %1174 = vrot.lane.b32.xlu0 %v919, 12
    %v1175 = vpop.permute.xlu0 %1174
    %1176 = vrot.lane.b32.xlu0 %v920, 12
    %v1177 = vpop.permute.xlu0 %1176
    %1178 = vrot.lane.b32.xlu0 %v921, 12
    %v1179 = vpop.permute.xlu0 %1178
    %1180 = vrot.lane.b32.xlu0 %v922, 12
    %v1181 = vpop.permute.xlu0 %1180
    %v1200 = vrot.slane %v914, 1
    %v1201 = vrot.slane %v930, 1
    %v1202 = vsel %vm968, %v1200, %v1201
    %v1203 = vrot.slane %v922, 1
    %v1204 = vrot.slane %v938, 1
    %v1205 = vsel %vm968, %v1203, %v1204
    %1206 = vrot.lane.b32.xlu0 %v973, 16
    %v1207 = vpop.permute.xlu0 %1206
    %1208 = vrot.lane.b32.xlu0 %v976, 16
    %v1209 = vpop.permute.xlu0 %1208
    %1210 = vrot.lane.b32.xlu0 %v979, 16
    %v1211 = vpop.permute.xlu0 %1210
    %1212 = vrot.lane.b32.xlu0 %v982, 16
    %v1213 = vpop.permute.xlu0 %1212
    %1214 = vrot.lane.b32.xlu0 %v985, 16
    %v1215 = vpop.permute.xlu0 %1214
    %1216 = vrot.lane.b32.xlu0 %v988, 16
    %v1217 = vpop.permute.xlu0 %1216
    %1218 = vrot.lane.b32.xlu0 %v991, 16
    %v1219 = vpop.permute.xlu0 %1218
    %1220 = vrot.lane.b32.xlu0 %v1202, 16
    %v1221 = vpop.permute.xlu0 %1220
    %1222 = vrot.lane.b32.xlu0 %v994, 16
    %v1223 = vpop.permute.xlu0 %1222
    %1224 = vrot.lane.b32.xlu0 %v997, 16
    %v1225 = vpop.permute.xlu0 %1224
    %1226 = vrot.lane.b32.xlu0 %v1000, 16
    %v1227 = vpop.permute.xlu0 %1226
    %1228 = vrot.lane.b32.xlu0 %v1003, 16
    %v1229 = vpop.permute.xlu0 %1228
    %1230 = vrot.lane.b32.xlu0 %v1006, 16
    %v1231 = vpop.permute.xlu0 %1230
    %1232 = vrot.lane.b32.xlu0 %v1009, 16
    %v1233 = vpop.permute.xlu0 %1232
    %1234 = vrot.lane.b32.xlu0 %v1012, 16
    %v1235 = vpop.permute.xlu0 %1234
    %1236 = vrot.lane.b32.xlu0 %v1205, 16
    %v1237 = vpop.permute.xlu0 %1236
    %v1254 = vrot.slane %v914, 2
    %v1255 = vrot.slane %v930, 2
    %v1256 = vsel %vm1058, %v1254, %v1255
    %v1257 = vrot.slane %v922, 2
    %v1258 = vrot.slane %v938, 2
    %v1259 = vsel %vm1058, %v1257, %v1258
    %1260 = vrot.lane.b32.xlu0 %v1063, 20
    %v1261 = vpop.permute.xlu0 %1260
    %1262 = vrot.lane.b32.xlu0 %v1066, 20
    %v1263 = vpop.permute.xlu0 %1262
    %1264 = vrot.lane.b32.xlu0 %v1069, 20
    %v1265 = vpop.permute.xlu0 %1264
    %1266 = vrot.lane.b32.xlu0 %v1072, 20
    %v1267 = vpop.permute.xlu0 %1266
    %1268 = vrot.lane.b32.xlu0 %v1075, 20
    %v1269 = vpop.permute.xlu0 %1268
    %1270 = vrot.lane.b32.xlu0 %v1078, 20
    %v1271 = vpop.permute.xlu0 %1270
    %1272 = vrot.lane.b32.xlu0 %v1081, 20
    %v1273 = vpop.permute.xlu0 %1272
    %1274 = vrot.lane.b32.xlu0 %v1256, 20
    %v1275 = vpop.permute.xlu0 %1274
    %1276 = vrot.lane.b32.xlu0 %v1084, 20
    %v1277 = vpop.permute.xlu0 %1276
    %1278 = vrot.lane.b32.xlu0 %v1087, 20
    %v1279 = vpop.permute.xlu0 %1278
    %1280 = vrot.lane.b32.xlu0 %v1090, 20
    %v1281 = vpop.permute.xlu0 %1280
    %1282 = vrot.lane.b32.xlu0 %v1093, 20
    %v1283 = vpop.permute.xlu0 %1282
    %1284 = vrot.lane.b32.xlu0 %v1096, 20
    %v1285 = vpop.permute.xlu0 %1284
    %1286 = vrot.lane.b32.xlu0 %v1099, 20
    %v1287 = vpop.permute.xlu0 %1286
    %1288 = vrot.lane.b32.xlu0 %v1102, 20
    %v1289 = vpop.permute.xlu0 %1288
    %1290 = vrot.lane.b32.xlu0 %v1259, 20
    %v1291 = vpop.permute.xlu0 %1290
    %1308 = vrot.lane.b32.xlu0 %v908, 24
    %v1309 = vpop.permute.xlu0 %1308
    %1310 = vrot.lane.b32.xlu0 %v909, 24
    %v1311 = vpop.permute.xlu0 %1310
    %1312 = vrot.lane.b32.xlu0 %v910, 24
    %v1313 = vpop.permute.xlu0 %1312
    %1314 = vrot.lane.b32.xlu0 %v911, 24
    %v1315 = vpop.permute.xlu0 %1314
    %1316 = vrot.lane.b32.xlu0 %v912, 24
    %v1317 = vpop.permute.xlu0 %1316
    %1318 = vrot.lane.b32.xlu0 %v913, 24
    %v1319 = vpop.permute.xlu0 %1318
    %1320 = vrot.lane.b32.xlu0 %v914, 24
    %v1321 = vpop.permute.xlu0 %1320
    %1322 = vrot.lane.b32.xlu0 0.0, 24
    %v1323 = vpop.permute.xlu0 %1322
    %1324 = vrot.lane.b32.xlu0 %v916, 24
    %v1325 = vpop.permute.xlu0 %1324
    %1326 = vrot.lane.b32.xlu0 %v917, 24
    %v1327 = vpop.permute.xlu0 %1326
    %1328 = vrot.lane.b32.xlu0 %v918, 24
    %v1329 = vpop.permute.xlu0 %1328
    %1330 = vrot.lane.b32.xlu0 %v919, 24
    %v1331 = vpop.permute.xlu0 %1330
    %1332 = vrot.lane.b32.xlu0 %v920, 24
    %v1333 = vpop.permute.xlu0 %1332
    %1334 = vrot.lane.b32.xlu0 %v921, 24
    %v1335 = vpop.permute.xlu0 %1334
    %1336 = vrot.lane.b32.xlu0 %v922, 24
    %v1337 = vpop.permute.xlu0 %1336
    %1353 = vrot.lane.b32.xlu0 %v976, 28
    %v1354 = vpop.permute.xlu0 %1353
    %1355 = vrot.lane.b32.xlu0 %v979, 28
    %v1356 = vpop.permute.xlu0 %1355
    %1357 = vrot.lane.b32.xlu0 %v982, 28
    %v1358 = vpop.permute.xlu0 %1357
    %1359 = vrot.lane.b32.xlu0 %v985, 28
    %v1360 = vpop.permute.xlu0 %1359
    %1361 = vrot.lane.b32.xlu0 %v988, 28
    %v1362 = vpop.permute.xlu0 %1361
    %1363 = vrot.lane.b32.xlu0 %v991, 28
    %v1364 = vpop.permute.xlu0 %1363
    %1365 = vrot.lane.b32.xlu0 %v1202, 28
    %v1366 = vpop.permute.xlu0 %1365
    %1367 = vrot.lane.b32.xlu0 %v970, 28
    %v1368 = vpop.permute.xlu0 %1367
    %1369 = vrot.lane.b32.xlu0 %v997, 28
    %v1370 = vpop.permute.xlu0 %1369
    %1371 = vrot.lane.b32.xlu0 %v1000, 28
    %v1372 = vpop.permute.xlu0 %1371
    %1373 = vrot.lane.b32.xlu0 %v1003, 28
    %v1374 = vpop.permute.xlu0 %1373
    %1375 = vrot.lane.b32.xlu0 %v1006, 28
    %v1376 = vpop.permute.xlu0 %1375
    %1377 = vrot.lane.b32.xlu0 %v1009, 28
    %v1378 = vpop.permute.xlu0 %1377
    %1379 = vrot.lane.b32.xlu0 %v1012, 28
    %v1380 = vpop.permute.xlu0 %1379
    %1381 = vrot.lane.b32.xlu0 %v1205, 28
    %v1382 = vpop.permute.xlu0 %1381
    %1398 = vrot.lane.b32.xlu0 %v1066, 32
    %v1399 = vpop.permute.xlu0 %1398
    %1400 = vrot.lane.b32.xlu0 %v1069, 32
    %v1401 = vpop.permute.xlu0 %1400
    %1402 = vrot.lane.b32.xlu0 %v1072, 32
    %v1403 = vpop.permute.xlu0 %1402
    %1404 = vrot.lane.b32.xlu0 %v1075, 32
    %v1405 = vpop.permute.xlu0 %1404
    %1406 = vrot.lane.b32.xlu0 %v1078, 32
    %v1407 = vpop.permute.xlu0 %1406
    %1408 = vrot.lane.b32.xlu0 %v1081, 32
    %v1409 = vpop.permute.xlu0 %1408
    %1410 = vrot.lane.b32.xlu0 %v1256, 32
    %v1411 = vpop.permute.xlu0 %1410
    %1412 = vrot.lane.b32.xlu0 %v1060, 32
    %v1413 = vpop.permute.xlu0 %1412
    %1414 = vrot.lane.b32.xlu0 %v1087, 32
    %v1415 = vpop.permute.xlu0 %1414
    %1416 = vrot.lane.b32.xlu0 %v1090, 32
    %v1417 = vpop.permute.xlu0 %1416
    %1418 = vrot.lane.b32.xlu0 %v1093, 32
    %v1419 = vpop.permute.xlu0 %1418
    %1420 = vrot.lane.b32.xlu0 %v1096, 32
    %v1421 = vpop.permute.xlu0 %1420
    %1422 = vrot.lane.b32.xlu0 %v1099, 32
    %v1423 = vpop.permute.xlu0 %1422
    %1424 = vrot.lane.b32.xlu0 %v1102, 32
    %v1425 = vpop.permute.xlu0 %1424
    %1426 = vrot.lane.b32.xlu0 %v1259, 32
    %v1427 = vpop.permute.xlu0 %1426
    %vm1443 = vcmask 31744
    %v1444 = vsel %vm1443, 0.0, %v1014
    %v1445 = vsel %vm1443, %v907, %v1016
    %v1446 = vsel %vm1443, %v908, %v1018
    %v1447 = vsel %vm1443, %v909, %v1020
    %v1448 = vsel %vm1443, %v910, %v1022
    %v1449 = vsel %vm1443, %v911, %v1024
    %v1450 = vsel %vm1443, %v912, %v1026
    %v1451 = vsel %vm1443, %v913, %v1028
    %v1452 = vsel %vm1443, %v915, %v1030
    %v1453 = vsel %vm1443, %v916, %v1032
    %v1454 = vsel %vm1443, %v917, %v1034
    %v1455 = vsel %vm1443, %v918, %v1036
    %v1456 = vsel %vm1443, %v919, %v1038
    %v1457 = vsel %vm1443, %v920, %v1040
    %v1458 = vsel %vm1443, %v921, %v1042
    %vm1459 = vcmask 64512
    %v1460 = vsel %vm1459, %v1444, %v1104
    %v1461 = vsel %vm1459, %v1445, %v1106
    %v1462 = vsel %vm1459, %v1446, %v1108
    %v1463 = vsel %vm1459, %v1447, %v1110
    %v1464 = vsel %vm1459, %v1448, %v1112
    %v1465 = vsel %vm1459, %v1449, %v1114
    %v1466 = vsel %vm1459, %v1450, %v1116
    %v1467 = vsel %vm1459, %v1451, %v1118
    %v1468 = vsel %vm1459, %v1452, %v1120
    %v1469 = vsel %vm1459, %v1453, %v1122
    %v1470 = vsel %vm1459, %v1454, %v1124
    %v1471 = vsel %vm1459, %v1455, %v1126
    %v1472 = vsel %vm1459, %v1456, %v1128
    %v1473 = vsel %vm1459, %v1457, %v1130
    %v1474 = vsel %vm1459, %v1458, %v1132
    %vm1475 = vcmask 97280
    %v1476 = vsel %vm1475, %v1460, %v1151
    %v1477 = vsel %vm1475, %v1461, %v1153
    %v1478 = vsel %vm1475, %v1462, %v1155
    %v1479 = vsel %vm1475, %v1463, %v1157
    %v1480 = vsel %vm1475, %v1464, %v1159
    %v1481 = vsel %vm1475, %v1465, %v1161
    %v1482 = vsel %vm1475, %v1466, %v1163
    %v1483 = vsel %vm1475, %v1467, %v1165
    %v1484 = vsel %vm1475, %v1460, %v1167
    %v1485 = vsel %vm1475, %v1468, %v1169
    %v1486 = vsel %vm1475, %v1469, %v1171
    %v1487 = vsel %vm1475, %v1470, %v1173
    %v1488 = vsel %vm1475, %v1471, %v1175
    %v1489 = vsel %vm1475, %v1472, %v1177
    %v1490 = vsel %vm1475, %v1473, %v1179
    %v1491 = vsel %vm1475, %v1474, %v1181
    %vm1492 = vcmask 130048
    %v1493 = vsel %vm1492, %v1476, %v1207
    %v1494 = vsel %vm1492, %v1477, %v1209
    %v1495 = vsel %vm1492, %v1478, %v1211
    %v1496 = vsel %vm1492, %v1479, %v1213
    %v1497 = vsel %vm1492, %v1480, %v1215
    %v1498 = vsel %vm1492, %v1481, %v1217
    %v1499 = vsel %vm1492, %v1482, %v1219
    %v1500 = vsel %vm1492, %v1483, %v1221
    %v1501 = vsel %vm1492, %v1484, %v1223
    %v1502 = vsel %vm1492, %v1485, %v1225
    %v1503 = vsel %vm1492, %v1486, %v1227
    %v1504 = vsel %vm1492, %v1487, %v1229
    %v1505 = vsel %vm1492, %v1488, %v1231
    %v1506 = vsel %vm1492, %v1489, %v1233
    %v1507 = vsel %vm1492, %v1490, %v1235
    %v1508 = vsel %vm1492, %v1491, %v1237
    %vm1509 = vcmask 162816
    %v1510 = vsel %vm1509, %v1493, %v1261
    %v1511 = vsel %vm1509, %v1494, %v1263
    %v1512 = vsel %vm1509, %v1495, %v1265
    %v1513 = vsel %vm1509, %v1496, %v1267
    %v1514 = vsel %vm1509, %v1497, %v1269
    %v1515 = vsel %vm1509, %v1498, %v1271
    %v1516 = vsel %vm1509, %v1499, %v1273
    %v1517 = vsel %vm1509, %v1500, %v1275
    %v1518 = vsel %vm1509, %v1501, %v1277
    %v1519 = vsel %vm1509, %v1502, %v1279
    %v1520 = vsel %vm1509, %v1503, %v1281
    %v1521 = vsel %vm1509, %v1504, %v1283
    %v1522 = vsel %vm1509, %v1505, %v1285
    %v1523 = vsel %vm1509, %v1506, %v1287
    %v1524 = vsel %vm1509, %v1507, %v1289
    %v1525 = vsel %vm1509, %v1508, %v1291
    %vm1526 = vcmask 195584
    %v1527 = vsel %vm1526, %v1510, %v1309
    %v1528 = vsel %vm1526, %v1511, %v1311
    %v1529 = vsel %vm1526, %v1512, %v1313
    %v1530 = vsel %vm1526, %v1513, %v1315
    %v1531 = vsel %vm1526, %v1514, %v1317
    %v1532 = vsel %vm1526, %v1515, %v1319
    %v1533 = vsel %vm1526, %v1516, %v1321
    %v1534 = vsel %vm1526, %v1517, %v1323
    %v1535 = vsel %vm1526, %v1518, %v1325
    %v1536 = vsel %vm1526, %v1519, %v1327
    %v1537 = vsel %vm1526, %v1520, %v1329
    %v1538 = vsel %vm1526, %v1521, %v1331
    %v1539 = vsel %vm1526, %v1522, %v1333
    %v1540 = vsel %vm1526, %v1523, %v1335
    %v1541 = vsel %vm1526, %v1524, %v1337
    %v1542 = vsel %vm1526, %v1525, %v1323
    %vm1543 = vcmask 228352
    %v1544 = vsel %vm1543, %v1527, %v1354
    %v1545 = vsel %vm1543, %v1528, %v1356
    %v1546 = vsel %vm1543, %v1529, %v1358
    %v1547 = vsel %vm1543, %v1530, %v1360
    %v1548 = vsel %vm1543, %v1531, %v1362
    %v1549 = vsel %vm1543, %v1532, %v1364
    %v1550 = vsel %vm1543, %v1533, %v1366
    %v1551 = vsel %vm1543, %v1534, %v1368
    %v1552 = vsel %vm1543, %v1535, %v1370
    %v1553 = vsel %vm1543, %v1536, %v1372
    %v1554 = vsel %vm1543, %v1537, %v1374
    %v1555 = vsel %vm1543, %v1538, %v1376
    %v1556 = vsel %vm1543, %v1539, %v1378
    %v1557 = vsel %vm1543, %v1540, %v1380
    %v1558 = vsel %vm1543, %v1541, %v1382
    %v1559 = vsel %vm1543, %v1542, %v1368
    %vm1560 = vcmask 261120
    %v1561 = vsel %vm1560, %v1544, %v1399
    %v1562 = vsel %vm1560, %v1545, %v1401
    %v1563 = vsel %vm1560, %v1546, %v1403
    %v1564 = vsel %vm1560, %v1547, %v1405
    %v1565 = vsel %vm1560, %v1548, %v1407
    %v1566 = vsel %vm1560, %v1549, %v1409
    %v1567 = vsel %vm1560, %v1550, %v1411
    %v1568 = vsel %vm1560, %v1551, %v1413
    %v1569 = vsel %vm1560, %v1552, %v1415
    %v1570 = vsel %vm1560, %v1553, %v1417
    %v1571 = vsel %vm1560, %v1554, %v1419
    %v1572 = vsel %vm1560, %v1555, %v1421
    %v1573 = vsel %vm1560, %v1556, %v1423
    %v1574 = vsel %vm1560, %v1557, %v1425
    %v1575 = vsel %vm1560, %v1558, %v1427
    %v1576 = vsel %vm1560, %v1559, %v1413
    %vm1577 = vcmask 293888
    %v1579 = vsel %vm1577, %v1561, 0
    %v1582 = vsel %vm1577, %v1562, 0
    %v1585 = vsel %vm1577, %v1563, 0
    %v1588 = vsel %vm1577, %v1564, 0
    %v1591 = vsel %vm1577, %v1565, 0
    %v1594 = vsel %vm1577, %v1566, 0
    %v1597 = vsel %vm1577, %v1567, 0
    %v1600 = vsel %vm1577, %v1568, 0
    %v1603 = vsel %vm1577, %v1569, 0
    %v1606 = vsel %vm1577, %v1570, 0
    %v1609 = vsel %vm1577, %v1571, 0
    %v1612 = vsel %vm1577, %v1572, 0
    %v1615 = vsel %vm1577, %v1573, 0
    %v1618 = vsel %vm1577, %v1574, 0
    %v1621 = vsel %vm1577, %v1575, 0
    %v1624 = vsel %vm1577, %v1576, 0
    %vm1626 = vcmask 1043456
    %v1628 = vsel %vm1626, %v857, 0
    %1630 = vmatprep.subr.mxu0 0.0
    %1631 = vmatpush1.msra.mxu0 %v853
    %1632 = vmatprep.subr.mxu0 0.0
    %1633 = vmatpush1.msra.mxu0 %v854
    %1634 = vmatprep.subr.mxu0 0.0
    %1635 = vmatpush1.msra.mxu0 %v855
    %1636 = vmatprep.subr.mxu0 0.0
    %1637 = vmatpush1.msra.mxu0 %v856
    %1638 = vmatprep.subr.mxu0 0.0
    %1639 = vmatpush1.msra.mxu0 %v1628
    %1640 = vmatprep.subr.mxu0 0.0
    %1641 = vmatpush1.msra.mxu0 0.0
    %1642 = vmatprep.subr.mxu0 0.0
    %1643 = vmatpush1.msra.mxu0 0.0
    %1644 = vmatprep.subr.mxu0 0.0
    %1645 = vmatpush1.msra.mxu0 0.0
    %1646 = vmatprep.subr.mxu0 0.0
    %1647 = vmatpush1.msra.mxu0 0.0
    %1648 = vmatprep.subr.mxu0 0.0
    %1649 = vmatpush1.msra.mxu0 0.0
    %1650 = vmatprep.subr.mxu0 0.0
    %1651 = vmatpush1.msra.mxu0 0.0
    %1652 = vmatprep.subr.mxu0 0.0
    %1653 = vmatpush1.msra.mxu0 0.0
    %1654 = vmatprep.subr.mxu0 0.0
    %1655 = vmatpush1.msra.mxu0 0.0
    %1656 = vmatprep.subr.mxu0 0.0
    %1657 = vmatpush1.msra.mxu0 0.0
    %1658 = vmatprep.subr.mxu0 0.0
    %1659 = vmatpush1.msra.mxu0 0.0
    %1660 = vmatprep.subr.mxu0 0.0
    %1661 = vmatpush1.msra.mxu0 0.0
    %1662 = vmatprep.subr.mxu0 0.0
    %1663 = vmatpush1.msra.mxu0 0.0
    %1664 = vmatprep.subr.mxu0 0.0
    %1665 = vmatpush1.msra.mxu0 0.0
    %1666 = vmatprep.subr.mxu0 0.0
    %1667 = vmatpush1.msra.mxu0 0.0
    %1668 = vmatprep.subr.mxu0 0.0
    %1669 = vmatpush1.msra.mxu0 0.0
    %1670 = vmatprep.subr.mxu0 0.0
    %1671 = vmatpush1.msra.mxu0 0.0
    %1672 = vmatprep.subr.mxu0 0.0
    %1673 = vmatpush1.msra.mxu0 0.0
    %1674 = vmatprep.subr.mxu0 0.0
    %1675 = vmatpush1.msra.mxu0 0.0
    %1676 = vmatprep.subr.mxu0 0.0
    %1677 = vmatpush1.msra.mxu0 0.0
    %1678 = vmatprep.subr.mxu0 0.0
    %1679 = vmatpush1.msra.mxu0 0.0
    %1680 = vmatprep.subr.mxu0 0.0
    %1681 = vmatpush1.msra.mxu0 0.0
    %1682 = vmatprep.subr.mxu0 0.0
    %1683 = vmatpush1.msra.mxu0 0.0
    %1684 = vmatprep.subr.mxu0 0.0
    %1685 = vmatpush1.msra.mxu0 0.0
    %1686 = vmatprep.subr.mxu0 0.0
    %1687 = vmatpush1.msra.mxu0 0.0
    %1688 = vmatprep.subr.mxu0 0.0
    %1689 = vmatpush1.msra.mxu0 0.0
    %1690 = vmatprep.subr.mxu0 0.0
    %1691 = vmatpush1.msra.mxu0 0.0
    %1692 = vmatprep.subr.mxu0 0.0
    %1693 = vmatpush1.msra.mxu0 0.0
    %1694 = vmatprep.mubr.f32.mxu0 0.0
    %1695 = vmatmul.mubr.f32.gmra.mrb[0].mxu0 %v1579
    %v1696 = vpop.f32.mrb[0].mxu0
    %v1697 = vadd.f32 0.0, %v1696
    %v1698 = vpop.f32.mrb[0].mxu0
    %1699 = vmatprep.mubr.f32.mxu0 0.0
    %1700 = vmatmul.mubr.f32.gmra.mrb[0].mxu0 %v1582
    %v1701 = vpop.f32.mrb[0].mxu0
    %v1702 = vadd.f32 0.0, %v1701
    %v1703 = vpop.f32.mrb[0].mxu0
    %1704 = vmatprep.mubr.f32.mxu0 0.0
    %1705 = vmatmul.mubr.f32.gmra.mrb[0].mxu0 %v1585
    %v1706 = vpop.f32.mrb[0].mxu0
    %v1707 = vadd.f32 0.0, %v1706
    %v1708 = vpop.f32.mrb[0].mxu0
    %1709 = vmatprep.mubr.f32.mxu0 0.0
    %1710 = vmatmul.mubr.f32.gmra.mrb[0].mxu0 %v1588
    %v1711 = vpop.f32.mrb[0].mxu0
    %v1712 = vadd.f32 0.0, %v1711
    %v1713 = vpop.f32.mrb[0].mxu0
    %1714 = vmatprep.mubr.f32.mxu0 0.0
    %1715 = vmatmul.mubr.f32.gmra.mrb[0].mxu0 %v1591
    %v1716 = vpop.f32.mrb[0].mxu0
    %v1717 = vadd.f32 0.0, %v1716
    %v1718 = vpop.f32.mrb[0].mxu0
    %1719 = vmatprep.mubr.f32.mxu0 0.0
    %1720 = vmatmul.mubr.f32.gmra.mrb[0].mxu0 %v1594
    %v1721 = vpop.f32.mrb[0].mxu0
    %v1722 = vadd.f32 0.0, %v1721
    %v1723 = vpop.f32.mrb[0].mxu0
    %1724 = vmatprep.mubr.f32.mxu0 0.0
    %1725 = vmatmul.mubr.f32.gmra.mrb[0].mxu0 %v1597
    %v1726 = vpop.f32.mrb[0].mxu0
    %v1727 = vadd.f32 0.0, %v1726
    %v1728 = vpop.f32.mrb[0].mxu0
    %1729 = vmatprep.mubr.f32.mxu0 0.0
    %1730 = vmatmul.mubr.f32.gmra.mrb[0].mxu0 %v1600
    %v1731 = vpop.f32.mrb[0].mxu0
    %v1732 = vadd.f32 0.0, %v1731
    %v1733 = vpop.f32.mrb[0].mxu0
    %1734 = vmatprep.mubr.f32.mxu0 0.0
    %1735 = vmatmul.mubr.f32.gmra.mrb[0].mxu0 %v1603
    %v1736 = vpop.f32.mrb[0].mxu0
    %v1737 = vadd.f32 0.0, %v1736
    %v1738 = vpop.f32.mrb[0].mxu0
    %1739 = vmatprep.mubr.f32.mxu0 0.0
    %1740 = vmatmul.mubr.f32.gmra.mrb[0].mxu0 %v1606
    %v1741 = vpop.f32.mrb[0].mxu0
    %v1742 = vadd.f32 0.0, %v1741
    %v1743 = vpop.f32.mrb[0].mxu0
    %1744 = vmatprep.mubr.f32.mxu0 0.0
    %1745 = vmatmul.mubr.f32.gmra.mrb[0].mxu0 %v1609
    %v1746 = vpop.f32.mrb[0].mxu0
    %v1747 = vadd.f32 0.0, %v1746
    %v1748 = vpop.f32.mrb[0].mxu0
    %1749 = vmatprep.mubr.f32.mxu0 0.0
    %1750 = vmatmul.mubr.f32.gmra.mrb[0].mxu0 %v1612
    %v1751 = vpop.f32.mrb[0].mxu0
    %v1752 = vadd.f32 0.0, %v1751
    %v1753 = vpop.f32.mrb[0].mxu0
    %1754 = vmatprep.mubr.f32.mxu0 0.0
    %1755 = vmatmul.mubr.f32.gmra.mrb[0].mxu0 %v1615
    %v1756 = vpop.f32.mrb[0].mxu0
    %v1757 = vadd.f32 0.0, %v1756
    %v1758 = vpop.f32.mrb[0].mxu0
    %1759 = vmatprep.mubr.f32.mxu0 0.0
    %1760 = vmatmul.mubr.f32.gmra.mrb[0].mxu0 %v1618
    %v1761 = vpop.f32.mrb[0].mxu0
    %v1762 = vadd.f32 0.0, %v1761
    %v1763 = vpop.f32.mrb[0].mxu0
    %1764 = vmatprep.mubr.f32.mxu0 0.0
    %1765 = vmatmul.mubr.f32.gmra.mrb[0].mxu0 %v1621
    %v1766 = vpop.f32.mrb[0].mxu0
    %v1767 = vadd.f32 0.0, %v1766
    %v1768 = vpop.f32.mrb[0].mxu0
    %1769 = vmatprep.mubr.f32.mxu0 0.0
    %1770 = vmatmul.mubr.f32.gmra.mrb[0].mxu0 %v1624
    %v1771 = vpop.f32.mrb[0].mxu0
    %v1772 = vadd.f32 0.0, %v1771
    %v1773 = vpop.f32.mrb[0].mxu0
    %1774 = vdwg.mxu0
    %v1775 = vld [vmem:[%s2] sm:$0x1]
    %v1776 = vld [vmem:[%s3] sm:$0x1]
    %v1777 = vsel %vm1459, %v1697, 0.0
    %v1778 = vsel %vm1459, %v1702, 0.0
    %v1779 = vadd.f32 %v1777, %v1778
    %v1780 = vsel %vm1459, %v1707, 0.0
    %v1781 = vadd.f32 %v1779, %v1780
    %v1782 = vsel %vm1459, %v1712, 0.0
    %v1783 = vadd.f32 %v1781, %v1782
    %v1784 = vsel %vm1459, %v1717, 0.0
    %v1785 = vadd.f32 %v1783, %v1784
    %v1786 = vsel %vm1459, %v1722, 0.0
    %v1787 = vadd.f32 %v1785, %v1786
    %v1788 = vsel %vm1459, %v1727, 0.0
    %v1789 = vadd.f32 %v1787, %v1788
    %v1790 = vsel %vm1459, %v1732, 0.0
    %v1791 = vadd.f32 %v1789, %v1790
    %v1792 = vsel %vm1459, %v1737, 0.0
    %v1793 = vadd.f32 %v1791, %v1792
    %v1794 = vsel %vm1459, %v1742, 0.0
    %v1795 = vadd.f32 %v1793, %v1794
    %v1796 = vsel %vm1459, %v1747, 0.0
    %v1797 = vadd.f32 %v1795, %v1796
    %v1798 = vsel %vm1459, %v1752, 0.0
    %v1799 = vadd.f32 %v1797, %v1798
    %v1800 = vsel %vm1459, %v1757, 0.0
    %v1801 = vadd.f32 %v1799, %v1800
    %v1802 = vsel %vm1459, %v1762, 0.0
    %v1803 = vadd.f32 %v1801, %v1802
    %v1804 = vsel %vm1459, %v1767, 0.0
    %v1805 = vadd.f32 %v1803, %v1804
    %v1806 = vsel %vm1459, %v1772, 0.0
    %v1807 = vadd.f32 %v1805, %v1806
    %v1808 = vrot.slane %v1807, 4
    %v1809 = vadd.f32 %v1807, %v1808
    %v1810 = vrot.slane %v1809, 2
    %v1811 = vadd.f32 %v1809, %v1810
    %v1812 = vrot.slane %v1811, 1
    %v1813 = vadd.f32 %v1811, %v1812
    %v1814 = vrcp.pop 128.0
    %v1815 = vmul.f32 %v1813, %v1814
    %v1816 = vsub.f32 %v1697, %v1815
    %v1817 = vsub.f32 %v1702, %v1815
    %v1818 = vsub.f32 %v1707, %v1815
    %v1819 = vsub.f32 %v1712, %v1815
    %v1820 = vsub.f32 %v1717, %v1815
    %v1821 = vsub.f32 %v1722, %v1815
    %v1822 = vsub.f32 %v1727, %v1815
    %v1823 = vsub.f32 %v1732, %v1815
    %v1824 = vsub.f32 %v1737, %v1815
    %v1825 = vsub.f32 %v1742, %v1815
    %v1826 = vsub.f32 %v1747, %v1815
    %v1827 = vsub.f32 %v1752, %v1815
    %v1828 = vsub.f32 %v1757, %v1815
    %v1829 = vsub.f32 %v1762, %v1815
    %v1830 = vsub.f32 %v1767, %v1815
    %v1831 = vsub.f32 %v1772, %v1815
    %v1832 = vmul.f32 %v1816, %v1816
    %v1833 = vmul.f32 %v1817, %v1817
    %v1834 = vmul.f32 %v1818, %v1818
    %v1835 = vmul.f32 %v1819, %v1819
    %v1836 = vmul.f32 %v1820, %v1820
    %v1837 = vmul.f32 %v1821, %v1821
    %v1838 = vmul.f32 %v1822, %v1822
    %v1839 = vmul.f32 %v1823, %v1823
    %v1840 = vmul.f32 %v1824, %v1824
    %v1841 = vmul.f32 %v1825, %v1825
    %v1842 = vmul.f32 %v1826, %v1826
    %v1843 = vmul.f32 %v1827, %v1827
    %v1844 = vmul.f32 %v1828, %v1828
    %v1845 = vmul.f32 %v1829, %v1829
    %v1846 = vmul.f32 %v1830, %v1830
    %v1847 = vmul.f32 %v1831, %v1831
    %v1848 = vsel %vm1459, %v1832, 0.0
    %v1849 = vsel %vm1459, %v1833, 0.0
    %v1850 = vadd.f32 %v1848, %v1849
    %v1851 = vsel %vm1459, %v1834, 0.0
    %v1852 = vadd.f32 %v1850, %v1851
    %v1853 = vsel %vm1459, %v1835, 0.0
    %v1854 = vadd.f32 %v1852, %v1853
    %v1855 = vsel %vm1459, %v1836, 0.0
    %v1856 = vadd.f32 %v1854, %v1855
    %v1857 = vsel %vm1459, %v1837, 0.0
    %v1858 = vadd.f32 %v1856, %v1857
    %v1859 = vsel %vm1459, %v1838, 0.0
    %v1860 = vadd.f32 %v1858, %v1859
    %v1861 = vsel %vm1459, %v1839, 0.0
    %v1862 = vadd.f32 %v1860, %v1861
    %v1863 = vsel %vm1459, %v1840, 0.0
    %v1864 = vadd.f32 %v1862, %v1863
    %v1865 = vsel %vm1459, %v1841, 0.0
    %v1866 = vadd.f32 %v1864, %v1865
    %v1867 = vsel %vm1459, %v1842, 0.0
    %v1868 = vadd.f32 %v1866, %v1867
    %v1869 = vsel %vm1459, %v1843, 0.0
    %v1870 = vadd.f32 %v1868, %v1869
    %v1871 = vsel %vm1459, %v1844, 0.0
    %v1872 = vadd.f32 %v1870, %v1871
    %v1873 = vsel %vm1459, %v1845, 0.0
    %v1874 = vadd.f32 %v1872, %v1873
    %v1875 = vsel %vm1459, %v1846, 0.0
    %v1876 = vadd.f32 %v1874, %v1875
    %v1877 = vsel %vm1459, %v1847, 0.0
    %v1878 = vadd.f32 %v1876, %v1877
    %v1879 = vrot.slane %v1878, 4
    %v1880 = vadd.f32 %v1878, %v1879
    %v1881 = vrot.slane %v1880, 2
    %v1882 = vadd.f32 %v1880, %v1881
    %v1883 = vrot.slane %v1882, 1
    %v1884 = vadd.f32 %v1882, %v1883
    %v1885 = vmul.f32 %v1884, %v1814
    %v1886 = vadd.f32 %v1885, 1e-05
    %v1887 = vrsqrt.pop %v1886
    %v1888 = vmul.f32 %v1775, %v1887
    %v1889 = vmul.f32 %v1815, %v1888
    %v1890 = vsub.f32 %v1776, %v1889
    %v1892 = vlaneseq
    %v1893 = vshrl.u32 %v1892, 7
    %v1894 = vsub.s32 0, %v1893
    %v1895 = vrot.slane %v1888, %v1894
    %v1897 = vmul.f32 %v1697, %v1895
    %v1898 = vmul.f32 %v1702, %v1895
    %v1899 = vmul.f32 %v1707, %v1895
    %v1900 = vmul.f32 %v1712, %v1895
    %v1901 = vmul.f32 %v1717, %v1895
    %v1902 = vmul.f32 %v1722, %v1895
    %v1903 = vmul.f32 %v1727, %v1895
    %v1904 = vmul.f32 %v1732, %v1895
    %v1905 = vmul.f32 %v1737, %v1895
    %v1906 = vmul.f32 %v1742, %v1895
    %v1907 = vmul.f32 %v1747, %v1895
    %v1908 = vmul.f32 %v1752, %v1895
    %v1909 = vmul.f32 %v1757, %v1895
    %v1910 = vmul.f32 %v1762, %v1895
    %v1911 = vmul.f32 %v1767, %v1895
    %v1912 = vmul.f32 %v1772, %v1895
    %v1914 = vlaneseq
    %v1915 = vshrl.u32 %v1914, 7
    %v1916 = vsub.s32 0, %v1915
    %v1917 = vrot.slane %v1890, %v1916
    %v1919 = vadd.f32 %v1897, %v1917
    %v1920 = vadd.f32 %v1898, %v1917
    %v1921 = vadd.f32 %v1899, %v1917
    %v1922 = vadd.f32 %v1900, %v1917
    %v1923 = vadd.f32 %v1901, %v1917
    %v1924 = vadd.f32 %v1902, %v1917
    %v1925 = vadd.f32 %v1903, %v1917
    %v1926 = vadd.f32 %v1904, %v1917
    %v1927 = vadd.f32 %v1905, %v1917
    %v1928 = vadd.f32 %v1906, %v1917
    %v1929 = vadd.f32 %v1907, %v1917
    %v1930 = vadd.f32 %v1908, %v1917
    %v1931 = vadd.f32 %v1909, %v1917
    %v1932 = vadd.f32 %v1910, %v1917
    %v1933 = vadd.f32 %v1911, %v1917
    %v1934 = vadd.f32 %v1912, %v1917
    %v1935 = vmax.f32 %v1919, 0.0
    %v1936 = vmax.f32 %v1920, 0.0
    %v1937 = vmax.f32 %v1921, 0.0
    %v1938 = vmax.f32 %v1922, 0.0
    %v1939 = vmax.f32 %v1923, 0.0
    %v1940 = vmax.f32 %v1924, 0.0
    %v1941 = vmax.f32 %v1925, 0.0
    %v1942 = vmax.f32 %v1926, 0.0
    %v1943 = vmax.f32 %v1927, 0.0
    %v1944 = vmax.f32 %v1928, 0.0
    %v1945 = vmax.f32 %v1929, 0.0
    %v1946 = vmax.f32 %v1930, 0.0
    %v1947 = vmax.f32 %v1931, 0.0
    %v1948 = vmax.f32 %v1932, 0.0
    %v1949 = vmax.f32 %v1933, 0.0
    %v1950 = vmax.f32 %v1934, 0.0
    %v1951 = vld [vmem:[#allocation2] sm:$0xff]
    %v1952 = vld [vmem:[#allocation2 + $0x8] sm:$0xff]
    %v1953 = vld [vmem:[#allocation2 + $0x10] sm:$0xff]
    %v1954 = vld [vmem:[#allocation2 + $0x18] sm:$0xff]
    %v1955 = vld [vmem:[#allocation2 + $0x20] sm:$0xff]
    %v1956 = vld [vmem:[#allocation2 + $0x28] sm:$0xff]
    %v1957 = vld [vmem:[#allocation2 + $0x30] sm:$0xff]
    %v1958 = vld [vmem:[#allocation2 + $0x38] sm:$0xff]
    %v1959 = vld [vmem:[#allocation2 + $0x40] sm:$0xff]
    %v1976 = vrot.slane %v1935, 7
    %v1977 = vrot.slane %v1936, 7
    %v1978 = vrot.slane %v1937, 7
    %v1979 = vrot.slane %v1938, 7
    %v1980 = vrot.slane %v1939, 7
    %v1981 = vrot.slane %v1940, 7
    %v1982 = vrot.slane %v1941, 7
    %v1983 = vrot.slane %v1942, 7
    %v1984 = vrot.slane %v1943, 7
    %v1985 = vrot.slane %v1944, 7
    %v1986 = vrot.slane %v1945, 7
    %v1987 = vrot.slane %v1946, 7
    %v1988 = vrot.slane %v1947, 7
    %v1989 = vrot.slane %v1948, 7
    %v1990 = vrot.slane %v1949, 7
    %v1991 = vrot.slane %v1950, 7
    %v2008 = vsel %vm906, 0.0, %v1976
    %v2009 = vsel %vm906, 0.0, %v1977
    %v2010 = vsel %vm906, 0.0, %v1978
    %v2011 = vsel %vm906, 0.0, %v1979
    %v2012 = vsel %vm906, 0.0, %v1980
    %v2013 = vsel %vm906, 0.0, %v1981
    %v2014 = vsel %vm906, 0.0, %v1982
    %v2015 = vsel %vm906, 0.0, %v1983
    %v2016 = vsel %vm906, 0.0, %v1984
    %v2017 = vsel %vm906, 0.0, %v1985
    %v2018 = vsel %vm906, 0.0, %v1986
    %v2019 = vsel %vm906, 0.0, %v1987
    %v2020 = vsel %vm906, 0.0, %v1988
    %v2021 = vsel %vm906, 0.0, %v1989
    %v2022 = vsel %vm906, 0.0, %v1990
    %v2023 = vsel %vm906, 0.0, %v1991
    %v2024 = vsel %vm906, %v1976, 0.0
    %v2025 = vsel %vm906, %v1977, 0.0
    %v2026 = vsel %vm906, %v1978, 0.0
    %v2027 = vsel %vm906, %v1979, 0.0
    %v2028 = vsel %vm906, %v1980, 0.0
    %v2029 = vsel %vm906, %v1981, 0.0
    %v2030 = vsel %vm906, %v1982, 0.0
    %v2031 = vsel %vm906, %v1983, 0.0
    %v2032 = vsel %vm906, %v1984, 0.0
    %v2033 = vsel %vm906, %v1985, 0.0
    %v2034 = vsel %vm906, %v1986, 0.0
    %v2035 = vsel %vm906, %v1987, 0.0
    %v2036 = vsel %vm906, %v1988, 0.0
    %v2037 = vsel %vm906, %v1989, 0.0
    %v2038 = vsel %vm906, %v1990, 0.0
    %v2039 = vsel %vm906, %v1991, 0.0
    %v2068 = vrot.slane %v2008, 1
    %v2069 = vrot.slane %v2024, 1
    %v2070 = vsel %vm968, %v2068, %v2069
    %v2071 = vrot.slane %v2009, 1
    %v2072 = vrot.slane %v2025, 1
    %v2073 = vsel %vm968, %v2071, %v2072
    %v2074 = vrot.slane %v2010, 1
    %v2075 = vrot.slane %v2026, 1
    %v2076 = vsel %vm968, %v2074, %v2075
    %v2077 = vrot.slane %v2011, 1
    %v2078 = vrot.slane %v2027, 1
    %v2079 = vsel %vm968, %v2077, %v2078
    %v2080 = vrot.slane %v2012, 1
    %v2081 = vrot.slane %v2028, 1
    %v2082 = vsel %vm968, %v2080, %v2081
    %v2083 = vrot.slane %v2013, 1
    %v2084 = vrot.slane %v2029, 1
    %v2085 = vsel %vm968, %v2083, %v2084
    %v2086 = vrot.slane %v2014, 1
    %v2087 = vrot.slane %v2030, 1
    %v2088 = vsel %vm968, %v2086, %v2087
    %v2089 = vrot.slane %v2016, 1
    %v2090 = vrot.slane %v2032, 1
    %v2091 = vsel %vm968, %v2089, %v2090
    %v2092 = vrot.slane %v2017, 1
    %v2093 = vrot.slane %v2033, 1
    %v2094 = vsel %vm968, %v2092, %v2093
    %v2095 = vrot.slane %v2018, 1
    %v2096 = vrot.slane %v2034, 1
    %v2097 = vsel %vm968, %v2095, %v2096
    %v2098 = vrot.slane %v2019, 1
    %v2099 = vrot.slane %v2035, 1
    %v2100 = vsel %vm968, %v2098, %v2099
    %v2101 = vrot.slane %v2020, 1
    %v2102 = vrot.slane %v2036, 1
    %v2103 = vsel %vm968, %v2101, %v2102
    %v2104 = vrot.slane %v2021, 1
    %v2105 = vrot.slane %v2037, 1
    %v2106 = vsel %vm968, %v2104, %v2105
    %v2107 = vrot.slane %v2022, 1
    %v2108 = vrot.slane %v2038, 1
    %v2109 = vsel %vm968, %v2107, %v2108
    %2110 = vrot.lane.b32.xlu0 %v970, 8
    %v2111 = vpop.permute.xlu0 %2110
    %2112 = vrot.lane.b32.xlu0 %v2070, 8
    %v2113 = vpop.permute.xlu0 %2112
    %2114 = vrot.lane.b32.xlu0 %v2073, 8
    %v2115 = vpop.permute.xlu0 %2114
    %2116 = vrot.lane.b32.xlu0 %v2076, 8
    %v2117 = vpop.permute.xlu0 %2116
    %2118 = vrot.lane.b32.xlu0 %v2079, 8
    %v2119 = vpop.permute.xlu0 %2118
    %2120 = vrot.lane.b32.xlu0 %v2082, 8
    %v2121 = vpop.permute.xlu0 %2120
    %2122 = vrot.lane.b32.xlu0 %v2085, 8
    %v2123 = vpop.permute.xlu0 %2122
    %2124 = vrot.lane.b32.xlu0 %v2088, 8
    %v2125 = vpop.permute.xlu0 %2124
    %2126 = vrot.lane.b32.xlu0 %v2091, 8
    %v2127 = vpop.permute.xlu0 %2126
    %2128 = vrot.lane.b32.xlu0 %v2094, 8
    %v2129 = vpop.permute.xlu0 %2128
    %2130 = vrot.lane.b32.xlu0 %v2097, 8
    %v2131 = vpop.permute.xlu0 %2130
    %2132 = vrot.lane.b32.xlu0 %v2100, 8
    %v2133 = vpop.permute.xlu0 %2132
    %2134 = vrot.lane.b32.xlu0 %v2103, 8
    %v2135 = vpop.permute.xlu0 %2134
    %2136 = vrot.lane.b32.xlu0 %v2106, 8
    %v2137 = vpop.permute.xlu0 %2136
    %2138 = vrot.lane.b32.xlu0 %v2109, 8
    %v2139 = vpop.permute.xlu0 %2138
    %v2155 = vrot.slane %v2008, 2
    %v2156 = vrot.slane %v2024, 2
    %v2157 = vsel %vm1058, %v2155, %v2156
    %v2158 = vrot.slane %v2009, 2
    %v2159 = vrot.slane %v2025, 2
    %v2160 = vsel %vm1058, %v2158, %v2159
    %v2161 = vrot.slane %v2010, 2
    %v2162 = vrot.slane %v2026, 2
    %v2163 = vsel %vm1058, %v2161, %v2162
    %v2164 = vrot.slane %v2011, 2
    %v2165 = vrot.slane %v2027, 2
    %v2166 = vsel %vm1058, %v2164, %v2165
    %v2167 = vrot.slane %v2012, 2
    %v2168 = vrot.slane %v2028, 2
    %v2169 = vsel %vm1058, %v2167, %v2168
    %v2170 = vrot.slane %v2013, 2
    %v2171 = vrot.slane %v2029, 2
    %v2172 = vsel %vm1058, %v2170, %v2171
    %v2173 = vrot.slane %v2014, 2
    %v2174 = vrot.slane %v2030, 2
    %v2175 = vsel %vm1058, %v2173, %v2174
    %v2176 = vrot.slane %v2016, 2
    %v2177 = vrot.slane %v2032, 2
    %v2178 = vsel %vm1058, %v2176, %v2177
    %v2179 = vrot.slane %v2017, 2
    %v2180 = vrot.slane %v2033, 2
    %v2181 = vsel %vm1058, %v2179, %v2180
    %v2182 = vrot.slane %v2018, 2
    %v2183 = vrot.slane %v2034, 2
    %v2184 = vsel %vm1058, %v2182, %v2183
    %v2185 = vrot.slane %v2019, 2
    %v2186 = vrot.slane %v2035, 2
    %v2187 = vsel %vm1058, %v2185, %v2186
    %v2188 = vrot.slane %v2020, 2
    %v2189 = vrot.slane %v2036, 2
    %v2190 = vsel %vm1058, %v2188, %v2189
    %v2191 = vrot.slane %v2021, 2
    %v2192 = vrot.slane %v2037, 2
    %v2193 = vsel %vm1058, %v2191, %v2192
    %v2194 = vrot.slane %v2022, 2
    %v2195 = vrot.slane %v2038, 2
    %v2196 = vsel %vm1058, %v2194, %v2195
    %2197 = vrot.lane.b32.xlu0 %v1060, 16
    %v2198 = vpop.permute.xlu0 %2197
    %2199 = vrot.lane.b32.xlu0 %v2157, 16
    %v2200 = vpop.permute.xlu0 %2199
    %2201 = vrot.lane.b32.xlu0 %v2160, 16
    %v2202 = vpop.permute.xlu0 %2201
    %2203 = vrot.lane.b32.xlu0 %v2163, 16
    %v2204 = vpop.permute.xlu0 %2203
    %2205 = vrot.lane.b32.xlu0 %v2166, 16
    %v2206 = vpop.permute.xlu0 %2205
    %2207 = vrot.lane.b32.xlu0 %v2169, 16
    %v2208 = vpop.permute.xlu0 %2207
    %2209 = vrot.lane.b32.xlu0 %v2172, 16
    %v2210 = vpop.permute.xlu0 %2209
    %2211 = vrot.lane.b32.xlu0 %v2175, 16
    %v2212 = vpop.permute.xlu0 %2211
    %2213 = vrot.lane.b32.xlu0 %v2178, 16
    %v2214 = vpop.permute.xlu0 %2213
    %2215 = vrot.lane.b32.xlu0 %v2181, 16
    %v2216 = vpop.permute.xlu0 %2215
    %2217 = vrot.lane.b32.xlu0 %v2184, 16
    %v2218 = vpop.permute.xlu0 %2217
    %2219 = vrot.lane.b32.xlu0 %v2187, 16
    %v2220 = vpop.permute.xlu0 %2219
    %2221 = vrot.lane.b32.xlu0 %v2190, 16
    %v2222 = vpop.permute.xlu0 %2221
    %2223 = vrot.lane.b32.xlu0 %v2193, 16
    %v2224 = vpop.permute.xlu0 %2223
    %2225 = vrot.lane.b32.xlu0 %v2196, 16
    %v2226 = vpop.permute.xlu0 %2225
    %2244 = vrot.lane.b32.xlu0 %v2008, 24
    %v2245 = vpop.permute.xlu0 %2244
    %2246 = vrot.lane.b32.xlu0 %v2009, 24
    %v2247 = vpop.permute.xlu0 %2246
    %2248 = vrot.lane.b32.xlu0 %v2010, 24
    %v2249 = vpop.permute.xlu0 %2248
    %2250 = vrot.lane.b32.xlu0 %v2011, 24
    %v2251 = vpop.permute.xlu0 %2250
    %2252 = vrot.lane.b32.xlu0 %v2012, 24
    %v2253 = vpop.permute.xlu0 %2252
    %2254 = vrot.lane.b32.xlu0 %v2013, 24
    %v2255 = vpop.permute.xlu0 %2254
    %2256 = vrot.lane.b32.xlu0 %v2014, 24
    %v2257 = vpop.permute.xlu0 %2256
    %2258 = vrot.lane.b32.xlu0 %v2015, 24
    %v2259 = vpop.permute.xlu0 %2258
    %2260 = vrot.lane.b32.xlu0 %v2016, 24
    %v2261 = vpop.permute.xlu0 %2260
    %2262 = vrot.lane.b32.xlu0 %v2017, 24
    %v2263 = vpop.permute.xlu0 %2262
    %2264 = vrot.lane.b32.xlu0 %v2018, 24
    %v2265 = vpop.permute.xlu0 %2264
    %2266 = vrot.lane.b32.xlu0 %v2019, 24
    %v2267 = vpop.permute.xlu0 %2266
    %2268 = vrot.lane.b32.xlu0 %v2020, 24
    %v2269 = vpop.permute.xlu0 %2268
    %2270 = vrot.lane.b32.xlu0 %v2021, 24
    %v2271 = vpop.permute.xlu0 %2270
    %2272 = vrot.lane.b32.xlu0 %v2022, 24
    %v2273 = vpop.permute.xlu0 %2272
    %2274 = vrot.lane.b32.xlu0 %v2023, 24
    %v2275 = vpop.permute.xlu0 %2274
    %v2294 = vrot.slane %v2015, 1
    %v2295 = vrot.slane %v2031, 1
    %v2296 = vsel %vm968, %v2294, %v2295
    %v2297 = vrot.slane %v2023, 1
    %v2298 = vrot.slane %v2039, 1
    %v2299 = vsel %vm968, %v2297, %v2298
    %2300 = vrot.lane.b32.xlu0 %v2070, 32
    %v2301 = vpop.permute.xlu0 %2300
    %2302 = vrot.lane.b32.xlu0 %v2073, 32
    %v2303 = vpop.permute.xlu0 %2302
    %2304 = vrot.lane.b32.xlu0 %v2076, 32
    %v2305 = vpop.permute.xlu0 %2304
    %2306 = vrot.lane.b32.xlu0 %v2079, 32
    %v2307 = vpop.permute.xlu0 %2306
    %2308 = vrot.lane.b32.xlu0 %v2082, 32
    %v2309 = vpop.permute.xlu0 %2308
    %2310 = vrot.lane.b32.xlu0 %v2085, 32
    %v2311 = vpop.permute.xlu0 %2310
    %2312 = vrot.lane.b32.xlu0 %v2088, 32
    %v2313 = vpop.permute.xlu0 %2312
    %2314 = vrot.lane.b32.xlu0 %v2296, 32
    %v2315 = vpop.permute.xlu0 %2314
    %2316 = vrot.lane.b32.xlu0 %v2091, 32
    %v2317 = vpop.permute.xlu0 %2316
    %2318 = vrot.lane.b32.xlu0 %v2094, 32
    %v2319 = vpop.permute.xlu0 %2318
    %2320 = vrot.lane.b32.xlu0 %v2097, 32
    %v2321 = vpop.permute.xlu0 %2320
    %2322 = vrot.lane.b32.xlu0 %v2100, 32
    %v2323 = vpop.permute.xlu0 %2322
    %2324 = vrot.lane.b32.xlu0 %v2103, 32
    %v2325 = vpop.permute.xlu0 %2324
    %2326 = vrot.lane.b32.xlu0 %v2106, 32
    %v2327 = vpop.permute.xlu0 %2326
    %2328 = vrot.lane.b32.xlu0 %v2109, 32
    %v2329 = vpop.permute.xlu0 %2328
    %2330 = vrot.lane.b32.xlu0 %v2299, 32
    %v2331 = vpop.permute.xlu0 %2330
    %v2348 = vrot.slane %v2015, 2
    %v2349 = vrot.slane %v2031, 2
    %v2350 = vsel %vm1058, %v2348, %v2349
    %v2351 = vrot.slane %v2023, 2
    %v2352 = vrot.slane %v2039, 2
    %v2353 = vsel %vm1058, %v2351, %v2352
    %2354 = vrot.lane.b32.xlu0 %v2157, 40
    %v2355 = vpop.permute.xlu0 %2354
    %2356 = vrot.lane.b32.xlu0 %v2160, 40
    %v2357 = vpop.permute.xlu0 %2356
    %2358 = vrot.lane.b32.xlu0 %v2163, 40
    %v2359 = vpop.permute.xlu0 %2358
    %2360 = vrot.lane.b32.xlu0 %v2166, 40
    %v2361 = vpop.permute.xlu0 %2360
    %2362 = vrot.lane.b32.xlu0 %v2169, 40
    %v2363 = vpop.permute.xlu0 %2362
    %2364 = vrot.lane.b32.xlu0 %v2172, 40
    %v2365 = vpop.permute.xlu0 %2364
    %2366 = vrot.lane.b32.xlu0 %v2175, 40
    %v2367 = vpop.permute.xlu0 %2366
    %2368 = vrot.lane.b32.xlu0 %v2350, 40
    %v2369 = vpop.permute.xlu0 %2368
    %2370 = vrot.lane.b32.xlu0 %v2178, 40
    %v2371 = vpop.permute.xlu0 %2370
    %2372 = vrot.lane.b32.xlu0 %v2181, 40
    %v2373 = vpop.permute.xlu0 %2372
    %2374 = vrot.lane.b32.xlu0 %v2184, 40
    %v2375 = vpop.permute.xlu0 %2374
    %2376 = vrot.lane.b32.xlu0 %v2187, 40
    %v2377 = vpop.permute.xlu0 %2376
    %2378 = vrot.lane.b32.xlu0 %v2190, 40
    %v2379 = vpop.permute.xlu0 %2378
    %2380 = vrot.lane.b32.xlu0 %v2193, 40
    %v2381 = vpop.permute.xlu0 %2380
    %2382 = vrot.lane.b32.xlu0 %v2196, 40
    %v2383 = vpop.permute.xlu0 %2382
    %2384 = vrot.lane.b32.xlu0 %v2353, 40
    %v2385 = vpop.permute.xlu0 %2384
    %2402 = vrot.lane.b32.xlu0 %v2009, 48
    %v2403 = vpop.permute.xlu0 %2402
    %2404 = vrot.lane.b32.xlu0 %v2010, 48
    %v2405 = vpop.permute.xlu0 %2404
    %2406 = vrot.lane.b32.xlu0 %v2011, 48
    %v2407 = vpop.permute.xlu0 %2406
    %2408 = vrot.lane.b32.xlu0 %v2012, 48
    %v2409 = vpop.permute.xlu0 %2408
    %2410 = vrot.lane.b32.xlu0 %v2013, 48
    %v2411 = vpop.permute.xlu0 %2410
    %2412 = vrot.lane.b32.xlu0 %v2014, 48
    %v2413 = vpop.permute.xlu0 %2412
    %2414 = vrot.lane.b32.xlu0 %v2015, 48
    %v2415 = vpop.permute.xlu0 %2414
    %2416 = vrot.lane.b32.xlu0 0.0, 48
    %v2417 = vpop.permute.xlu0 %2416
    %2418 = vrot.lane.b32.xlu0 %v2017, 48
    %v2419 = vpop.permute.xlu0 %2418
    %2420 = vrot.lane.b32.xlu0 %v2018, 48
    %v2421 = vpop.permute.xlu0 %2420
    %2422 = vrot.lane.b32.xlu0 %v2019, 48
    %v2423 = vpop.permute.xlu0 %2422
    %2424 = vrot.lane.b32.xlu0 %v2020, 48
    %v2425 = vpop.permute.xlu0 %2424
    %2426 = vrot.lane.b32.xlu0 %v2021, 48
    %v2427 = vpop.permute.xlu0 %2426
    %2428 = vrot.lane.b32.xlu0 %v2022, 48
    %v2429 = vpop.permute.xlu0 %2428
    %2430 = vrot.lane.b32.xlu0 %v2023, 48
    %v2431 = vpop.permute.xlu0 %2430
    %2447 = vrot.lane.b32.xlu0 %v2073, 56
    %v2448 = vpop.permute.xlu0 %2447
    %2449 = vrot.lane.b32.xlu0 %v2076, 56
    %v2450 = vpop.permute.xlu0 %2449
    %2451 = vrot.lane.b32.xlu0 %v2079, 56
    %v2452 = vpop.permute.xlu0 %2451
    %2453 = vrot.lane.b32.xlu0 %v2082, 56
    %v2454 = vpop.permute.xlu0 %2453
    %2455 = vrot.lane.b32.xlu0 %v2085, 56
    %v2456 = vpop.permute.xlu0 %2455
    %2457 = vrot.lane.b32.xlu0 %v2088, 56
    %v2458 = vpop.permute.xlu0 %2457
    %2459 = vrot.lane.b32.xlu0 %v2296, 56
    %v2460 = vpop.permute.xlu0 %2459
    %2461 = vrot.lane.b32.xlu0 %v970, 56
    %v2462 = vpop.permute.xlu0 %2461
    %2463 = vrot.lane.b32.xlu0 %v2094, 56
    %v2464 = vpop.permute.xlu0 %2463
    %2465 = vrot.lane.b32.xlu0 %v2097, 56
    %v2466 = vpop.permute.xlu0 %2465
    %2467 = vrot.lane.b32.xlu0 %v2100, 56
    %v2468 = vpop.permute.xlu0 %2467
    %2469 = vrot.lane.b32.xlu0 %v2103, 56
    %v2470 = vpop.permute.xlu0 %2469
    %2471 = vrot.lane.b32.xlu0 %v2106, 56
    %v2472 = vpop.permute.xlu0 %2471
    %2473 = vrot.lane.b32.xlu0 %v2109, 56
    %v2474 = vpop.permute.xlu0 %2473
    %2475 = vrot.lane.b32.xlu0 %v2299, 56
    %v2476 = vpop.permute.xlu0 %2475
    %2492 = vrot.lane.b32.xlu0 %v2160, 64
    %v2493 = vpop.permute.xlu0 %2492
    %2494 = vrot.lane.b32.xlu0 %v2163, 64
    %v2495 = vpop.permute.xlu0 %2494
    %2496 = vrot.lane.b32.xlu0 %v2166, 64
    %v2497 = vpop.permute.xlu0 %2496
    %2498 = vrot.lane.b32.xlu0 %v2169, 64
    %v2499 = vpop.permute.xlu0 %2498
    %2500 = vrot.lane.b32.xlu0 %v2172, 64
    %v2501 = vpop.permute.xlu0 %2500
    %2502 = vrot.lane.b32.xlu0 %v2175, 64
    %v2503 = vpop.permute.xlu0 %2502
    %2504 = vrot.lane.b32.xlu0 %v2350, 64
    %v2505 = vpop.permute.xlu0 %2504
    %2506 = vrot.lane.b32.xlu0 %v1060, 64
    %v2507 = vpop.permute.xlu0 %2506
    %2508 = vrot.lane.b32.xlu0 %v2181, 64
    %v2509 = vpop.permute.xlu0 %2508
    %2510 = vrot.lane.b32.xlu0 %v2184, 64
    %v2511 = vpop.permute.xlu0 %2510
    %2512 = vrot.lane.b32.xlu0 %v2187, 64
    %v2513 = vpop.permute.xlu0 %2512
    %2514 = vrot.lane.b32.xlu0 %v2190, 64
    %v2515 = vpop.permute.xlu0 %2514
    %2516 = vrot.lane.b32.xlu0 %v2193, 64
    %v2517 = vpop.permute.xlu0 %2516
    %2518 = vrot.lane.b32.xlu0 %v2196, 64
    %v2519 = vpop.permute.xlu0 %2518
    %2520 = vrot.lane.b32.xlu0 %v2353, 64
    %v2521 = vpop.permute.xlu0 %2520
    %v2537 = vsel %vm1459, 0.0, %v2111
    %v2538 = vsel %vm1459, %v2008, %v2113
    %v2539 = vsel %vm1459, %v2009, %v2115
    %v2540 = vsel %vm1459, %v2010, %v2117
    %v2541 = vsel %vm1459, %v2011, %v2119
    %v2542 = vsel %vm1459, %v2012, %v2121
    %v2543 = vsel %vm1459, %v2013, %v2123
    %v2544 = vsel %vm1459, %v2014, %v2125
    %v2545 = vsel %vm1459, %v2016, %v2127
    %v2546 = vsel %vm1459, %v2017, %v2129
    %v2547 = vsel %vm1459, %v2018, %v2131
    %v2548 = vsel %vm1459, %v2019, %v2133
    %v2549 = vsel %vm1459, %v2020, %v2135
    %v2550 = vsel %vm1459, %v2021, %v2137
    %v2551 = vsel %vm1459, %v2022, %v2139
    %v2552 = vsel %vm1492, %v2537, %v2198
    %v2553 = vsel %vm1492, %v2538, %v2200
    %v2554 = vsel %vm1492, %v2539, %v2202
    %v2555 = vsel %vm1492, %v2540, %v2204
    %v2556 = vsel %vm1492, %v2541, %v2206
    %v2557 = vsel %vm1492, %v2542, %v2208
    %v2558 = vsel %vm1492, %v2543, %v2210
    %v2559 = vsel %vm1492, %v2544, %v2212
    %v2560 = vsel %vm1492, %v2545, %v2214
    %v2561 = vsel %vm1492, %v2546, %v2216
    %v2562 = vsel %vm1492, %v2547, %v2218
    %v2563 = vsel %vm1492, %v2548, %v2220
    %v2564 = vsel %vm1492, %v2549, %v2222
    %v2565 = vsel %vm1492, %v2550, %v2224
    %v2566 = vsel %vm1492, %v2551, %v2226
    %v2567 = vsel %vm1526, %v2552, %v2245
    %v2568 = vsel %vm1526, %v2553, %v2247
    %v2569 = vsel %vm1526, %v2554, %v2249
    %v2570 = vsel %vm1526, %v2555, %v2251
    %v2571 = vsel %vm1526, %v2556, %v2253
    %v2572 = vsel %vm1526, %v2557, %v2255
    %v2573 = vsel %vm1526, %v2558, %v2257
    %v2574 = vsel %vm1526, %v2559, %v2259
    %v2575 = vsel %vm1526, %v2552, %v2261
    %v2576 = vsel %vm1526, %v2560, %v2263
    %v2577 = vsel %vm1526, %v2561, %v2265
    %v2578 = vsel %vm1526, %v2562, %v2267
    %v2579 = vsel %vm1526, %v2563, %v2269
    %v2580 = vsel %vm1526, %v2564, %v2271
    %v2581 = vsel %vm1526, %v2565, %v2273
    %v2582 = vsel %vm1526, %v2566, %v2275
    %v2583 = vsel %vm1560, %v2567, %v2301
    %v2584 = vsel %vm1560, %v2568, %v2303
    %v2585 = vsel %vm1560, %v2569, %v2305
    %v2586 = vsel %vm1560, %v2570, %v2307
    %v2587 = vsel %vm1560, %v2571, %v2309
    %v2588 = vsel %vm1560, %v2572, %v2311
    %v2589 = vsel %vm1560, %v2573, %v2313
    %v2590 = vsel %vm1560, %v2574, %v2315
    %v2591 = vsel %vm1560, %v2575, %v2317
    %v2592 = vsel %vm1560, %v2576, %v2319
    %v2593 = vsel %vm1560, %v2577, %v2321
    %v2594 = vsel %vm1560, %v2578, %v2323
    %v2595 = vsel %vm1560, %v2579, %v2325
    %v2596 = vsel %vm1560, %v2580, %v2327
    %v2597 = vsel %vm1560, %v2581, %v2329
    %v2598 = vsel %vm1560, %v2582, %v2331
    %vm2599 = vcmask 326656
    %v2600 = vsel %vm2599, %v2583, %v2355
    %v2601 = vsel %vm2599, %v2584, %v2357
    %v2602 = vsel %vm2599, %v2585, %v2359
    %v2603 = vsel %vm2599, %v2586, %v2361
    %v2604 = vsel %vm2599, %v2587, %v2363
    %v2605 = vsel %vm2599, %v2588, %v2365
    %v2606 = vsel %vm2599, %v2589, %v2367
    %v2607 = vsel %vm2599, %v2590, %v2369
    %v2608 = vsel %vm2599, %v2591, %v2371
    %v2609 = vsel %vm2599, %v2592, %v2373
    %v2610 = vsel %vm2599, %v2593, %v2375
    %v2611 = vsel %vm2599, %v2594, %v2377
    %v2612 = vsel %vm2599, %v2595, %v2379
    %v2613 = vsel %vm2599, %v2596, %v2381
    %v2614 = vsel %vm2599, %v2597, %v2383
    %v2615 = vsel %vm2599, %v2598, %v2385
    %vm2616 = vcmask 392192
    %v2617 = vsel %vm2616, %v2600, %v2403
    %v2618 = vsel %vm2616, %v2601, %v2405
    %v2619 = vsel %vm2616, %v2602, %v2407
    %v2620 = vsel %vm2616, %v2603, %v2409
    %v2621 = vsel %vm2616, %v2604, %v2411
    %v2622 = vsel %vm2616, %v2605, %v2413
    %v2623 = vsel %vm2616, %v2606, %v2415
    %v2624 = vsel %vm2616, %v2607, %v2417
    %v2625 = vsel %vm2616, %v2608, %v2419
    %v2626 = vsel %vm2616, %v2609, %v2421
    %v2627 = vsel %vm2616, %v2610, %v2423
    %v2628 = vsel %vm2616, %v2611, %v2425
    %v2629 = vsel %vm2616, %v2612, %v2427
    %v2630 = vsel %vm2616, %v2613, %v2429
    %v2631 = vsel %vm2616, %v2614, %v2431
    %v2632 = vsel %vm2616, %v2615, %v2417
    %vm2633 = vcmask 457728
    %v2634 = vsel %vm2633, %v2617, %v2448
    %v2635 = vsel %vm2633, %v2618, %v2450
    %v2636 = vsel %vm2633, %v2619, %v2452
    %v2637 = vsel %vm2633, %v2620, %v2454
    %v2638 = vsel %vm2633, %v2621, %v2456
    %v2639 = vsel %vm2633, %v2622, %v2458
    %v2640 = vsel %vm2633, %v2623, %v2460
    %v2641 = vsel %vm2633, %v2624, %v2462
    %v2642 = vsel %vm2633, %v2625, %v2464
    %v2643 = vsel %vm2633, %v2626, %v2466
    %v2644 = vsel %vm2633, %v2627, %v2468
    %v2645 = vsel %vm2633, %v2628, %v2470
    %v2646 = vsel %vm2633, %v2629, %v2472
    %v2647 = vsel %vm2633, %v2630, %v2474
    %v2648 = vsel %vm2633, %v2631, %v2476
    %v2649 = vsel %vm2633, %v2632, %v2462
    %vm2650 = vcmask 523264
    %v2651 = vsel %vm2650, %v2634, %v2493
    %v2652 = vsel %vm2650, %v2635, %v2495
    %v2653 = vsel %vm2650, %v2636, %v2497
    %v2654 = vsel %vm2650, %v2637, %v2499
    %v2655 = vsel %vm2650, %v2638, %v2501
    %v2656 = vsel %vm2650, %v2639, %v2503
    %v2657 = vsel %vm2650, %v2640, %v2505
    %v2658 = vsel %vm2650, %v2641, %v2507
    %v2659 = vsel %vm2650, %v2642, %v2509
    %v2660 = vsel %vm2650, %v2643, %v2511
    %v2661 = vsel %vm2650, %v2644, %v2513
    %v2662 = vsel %vm2650, %v2645, %v2515
    %v2663 = vsel %vm2650, %v2646, %v2517
    %v2664 = vsel %vm2650, %v2647, %v2519
    %v2665 = vsel %vm2650, %v2648, %v2521
    %v2666 = vsel %vm2650, %v2649, %v2507
    %vm2667 = vcmask 588800
    %v2669 = vsel %vm2667, %v2651, 0
    %v2672 = vsel %vm2667, %v2652, 0
    %v2675 = vsel %vm2667, %v2653, 0
    %v2678 = vsel %vm2667, %v2654, 0
    %v2681 = vsel %vm2667, %v2655, 0
    %v2684 = vsel %vm2667, %v2656, 0
    %v2687 = vsel %vm2667, %v2657, 0
    %v2690 = vsel %vm2667, %v2658, 0
    %v2693 = vsel %vm2667, %v2659, 0
    %v2696 = vsel %vm2667, %v2660, 0
    %v2699 = vsel %vm2667, %v2661, 0
    %v2702 = vsel %vm2667, %v2662, 0
    %v2705 = vsel %vm2667, %v2663, 0
    %v2708 = vsel %vm2667, %v2664, 0
    %v2711 = vsel %vm2667, %v2665, 0
    %v2714 = vsel %vm2667, %v2666, 0
    %2716 = vmatprep.subr.mxu0 0.0
    %2717 = vmatpush1.msra.mxu0 %v1951
    %2718 = vmatprep.subr.mxu0 0.0
    %2719 = vmatpush1.msra.mxu0 %v1952
    %2720 = vmatprep.subr.mxu0 0.0
    %2721 = vmatpush1.msra.mxu0 %v1953
    %2722 = vmatprep.subr.mxu0 0.0
    %2723 = vmatpush1.msra.mxu0 %v1954
    %2724 = vmatprep.subr.mxu0 0.0
    %2725 = vmatpush1.msra.mxu0 %v1955
    %2726 = vmatprep.subr.mxu0 0.0
    %2727 = vmatpush1.msra.mxu0 %v1956
    %2728 = vmatprep.subr.mxu0 0.0
    %2729 = vmatpush1.msra.mxu0 %v1957
    %2730 = vmatprep.subr.mxu0 0.0
    %2731 = vmatpush1.msra.mxu0 %v1958
    %2732 = vmatprep.subr.mxu0 0.0
    %2733 = vmatpush1.msra.mxu0 %v1959
    %2734 = vmatprep.subr.mxu0 0.0
    %2735 = vmatpush1.msra.mxu0 0.0
    %2736 = vmatprep.subr.mxu0 0.0
    %2737 = vmatpush1.msra.mxu0 0.0
    %2738 = vmatprep.subr.mxu0 0.0
    %2739 = vmatpush1.msra.mxu0 0.0
    %2740 = vmatprep.subr.mxu0 0.0
    %2741 = vmatpush1.msra.mxu0 0.0
    %2742 = vmatprep.subr.mxu0 0.0
    %2743 = vmatpush1.msra.mxu0 0.0
    %2744 = vmatprep.subr.mxu0 0.0
    %2745 = vmatpush1.msra.mxu0 0.0
    %2746 = vmatprep.subr.mxu0 0.0
    %2747 = vmatpush1.msra.mxu0 0.0
    %2748 = vmatprep.subr.mxu0 0.0
    %2749 = vmatpush1.msra.mxu0 0.0
    %2750 = vmatprep.subr.mxu0 0.0
    %2751 = vmatpush1.msra.mxu0 0.0
    %2752 = vmatprep.subr.mxu0 0.0
    %2753 = vmatpush1.msra.mxu0 0.0
    %2754 = vmatprep.subr.mxu0 0.0
    %2755 = vmatpush1.msra.mxu0 0.0
    %2756 = vmatprep.subr.mxu0 0.0
    %2757 = vmatpush1.msra.mxu0 0.0
    %2758 = vmatprep.subr.mxu0 0.0
    %2759 = vmatpush1.msra.mxu0 0.0
    %2760 = vmatprep.subr.mxu0 0.0
    %2761 = vmatpush1.msra.mxu0 0.0
    %2762 = vmatprep.subr.mxu0 0.0
    %2763 = vmatpush1.msra.mxu0 0.0
    %2764 = vmatprep.subr.mxu0 0.0
    %2765 = vmatpush1.msra.mxu0 0.0
    %2766 = vmatprep.subr.mxu0 0.0
    %2767 = vmatpush1.msra.mxu0 0.0
    %2768 = vmatprep.subr.mxu0 0.0
    %2769 = vmatpush1.msra.mxu0 0.0
    %2770 = vmatprep.subr.mxu0 0.0
    %2771 = vmatpush1.msra.mxu0 0.0
    %2772 = vmatprep.subr.mxu0 0.0
    %2773 = vmatpush1.msra.mxu0 0.0
    %2774 = vmatprep.subr.mxu0 0.0
    %2775 = vmatpush1.msra.mxu0 0.0
    %2776 = vmatprep.subr.mxu0 0.0
    %2777 = vmatpush1.msra.mxu0 0.0
    %2778 = vmatprep.subr.mxu0 0.0
    %2779 = vmatpush1.msra.mxu0 0.0
    %2780 = vmatprep.mubr.f32.mxu0 0.0
    %2781 = vmatmul.mubr.f32.gmra.mrb[0].mxu0 %v2669
    %v2782 = vpop.f32.mrb[0].mxu0
    %v2783 = vadd.f32 0.0, %v2782
    %v2784 = vpop.f32.mrb[0].mxu0
    %2785 = vmatprep.mubr.f32.mxu0 0.0
    %2786 = vmatmul.mubr.f32.gmra.mrb[0].mxu0 %v2672
    %v2787 = vpop.f32.mrb[0].mxu0
    %v2788 = vadd.f32 0.0, %v2787
    %v2789 = vpop.f32.mrb[0].mxu0
    %2790 = vmatprep.mubr.f32.mxu0 0.0
    %2791 = vmatmul.mubr.f32.gmra.mrb[0].mxu0 %v2675
    %v2792 = vpop.f32.mrb[0].mxu0
    %v2793 = vadd.f32 0.0, %v2792
    %v2794 = vpop.f32.mrb[0].mxu0
    %2795 = vmatprep.mubr.f32.mxu0 0.0
    %2796 = vmatmul.mubr.f32.gmra.mrb[0].mxu0 %v2678
    %v2797 = vpop.f32.mrb[0].mxu0
    %v2798 = vadd.f32 0.0, %v2797
    %v2799 = vpop.f32.mrb[0].mxu0
    %2800 = vmatprep.mubr.f32.mxu0 0.0
    %2801 = vmatmul.mubr.f32.gmra.mrb[0].mxu0 %v2681
    %v2802 = vpop.f32.mrb[0].mxu0
    %v2803 = vadd.f32 0.0, %v2802
    %v2804 = vpop.f32.mrb[0].mxu0
    %2805 = vmatprep.mubr.f32.mxu0 0.0
    %2806 = vmatmul.mubr.f32.gmra.mrb[0].mxu0 %v2684
    %v2807 = vpop.f32.mrb[0].mxu0
    %v2808 = vadd.f32 0.0, %v2807
    %v2809 = vpop.f32.mrb[0].mxu0
    %2810 = vmatprep.mubr.f32.mxu0 0.0
    %2811 = vmatmul.mubr.f32.gmra.mrb[0].mxu0 %v2687
    %v2812 = vpop.f32.mrb[0].mxu0
    %v2813 = vadd.f32 0.0, %v2812
    %v2814 = vpop.f32.mrb[0].mxu0
    %2815 = vmatprep.mubr.f32.mxu0 0.0
    %2816 = vmatmul.mubr.f32.gmra.mrb[0].mxu0 %v2690
    %v2817 = vpop.f32.mrb[0].mxu0
    %v2818 = vadd.f32 0.0, %v2817
    %v2819 = vpop.f32.mrb[0].mxu0
    %2820 = vmatprep.mubr.f32.mxu0 0.0
    %2821 = vmatmul.mubr.f32.gmra.mrb[0].mxu0 %v2693
    %v2822 = vpop.f32.mrb[0].mxu0
    %v2823 = vadd.f32 0.0, %v2822
    %v2824 = vpop.f32.mrb[0].mxu0
    %2825 = vmatprep.mubr.f32.mxu0 0.0
    %2826 = vmatmul.mubr.f32.gmra.mrb[0].mxu0 %v2696
    %v2827 = vpop.f32.mrb[0].mxu0
    %v2828 = vadd.f32 0.0, %v2827
    %v2829 = vpop.f32.mrb[0].mxu0
    %2830 = vmatprep.mubr.f32.mxu0 0.0
    %2831 = vmatmul.mubr.f32.gmra.mrb[0].mxu0 %v2699
    %v2832 = vpop.f32.mrb[0].mxu0
    %v2833 = vadd.f32 0.0, %v2832
    %v2834 = vpop.f32.mrb[0].mxu0
    %2835 = vmatprep.mubr.f32.mxu0 0.0
    %2836 = vmatmul.mubr.f32.gmra.mrb[0].mxu0 %v2702
    %v2837 = vpop.f32.mrb[0].mxu0
    %v2838 = vadd.f32 0.0, %v2837
    %v2839 = vpop.f32.mrb[0].mxu0
    %2840 = vmatprep.mubr.f32.mxu0 0.0
    %2841 = vmatmul.mubr.f32.gmra.mrb[0].mxu0 %v2705
    %v2842 = vpop.f32.mrb[0].mxu0
    %v2843 = vadd.f32 0.0, %v2842
    %v2844 = vpop.f32.mrb[0].mxu0
    %2845 = vmatprep.mubr.f32.mxu0 0.0
    %2846 = vmatmul.mubr.f32.gmra.mrb[0].mxu0 %v2708
    %v2847 = vpop.f32.mrb[0].mxu0
    %v2848 = vadd.f32 0.0, %v2847
    %v2849 = vpop.f32.mrb[0].mxu0
    %2850 = vmatprep.mubr.f32.mxu0 0.0
    %2851 = vmatmul.mubr.f32.gmra.mrb[0].mxu0 %v2711
    %v2852 = vpop.f32.mrb[0].mxu0
    %v2853 = vadd.f32 0.0, %v2852
    %v2854 = vpop.f32.mrb[0].mxu0
    %2855 = vmatprep.mubr.f32.mxu0 0.0
    %2856 = vmatmul.mubr.f32.gmra.mrb[0].mxu0 %v2714
    %v2857 = vpop.f32.mrb[0].mxu0
    %v2858 = vadd.f32 0.0, %v2857
    %v2859 = vpop.f32.mrb[0].mxu0
    %2860 = vdwg.mxu0
    %v2861 = vld [vmem:[%s5] sm:$0x1]
    %v2862 = vld [vmem:[%s6] sm:$0x1]
    %v2863 = vadd.f32 %v2783, %v2788
    %v2864 = vadd.f32 %v2863, %v2793
    %v2865 = vadd.f32 %v2864, %v2798
    %v2866 = vadd.f32 %v2865, %v2803
    %v2867 = vadd.f32 %v2866, %v2808
    %v2868 = vadd.f32 %v2867, %v2813
    %v2869 = vadd.f32 %v2868, %v2818
    %v2870 = vadd.f32 %v2869, %v2823
    %v2871 = vadd.f32 %v2870, %v2828
    %v2872 = vadd.f32 %v2871, %v2833
    %v2873 = vadd.f32 %v2872, %v2838
    %v2874 = vadd.f32 %v2873, %v2843
    %v2875 = vadd.f32 %v2874, %v2848
    %v2876 = vadd.f32 %v2875, %v2853
    %v2877 = vadd.f32 %v2876, %v2858
    %v2878 = vrot.slane %v2877, 4
    %v2879 = vadd.f32 %v2877, %v2878
    %v2880 = vrot.slane %v2879, 2
    %v2881 = vadd.f32 %v2879, %v2880
    %v2882 = vrot.slane %v2881, 1
    %v2883 = vadd.f32 %v2881, %v2882
    %v2884 = vmul.f32 %v2883, %v1814
    %v2885 = vsub.f32 %v2783, %v2884
    %v2886 = vsub.f32 %v2788, %v2884
    %v2887 = vsub.f32 %v2793, %v2884
    %v2888 = vsub.f32 %v2798, %v2884
    %v2889 = vsub.f32 %v2803, %v2884
    %v2890 = vsub.f32 %v2808, %v2884
    %v2891 = vsub.f32 %v2813, %v2884
    %v2892 = vsub.f32 %v2818, %v2884
    %v2893 = vsub.f32 %v2823, %v2884
    %v2894 = vsub.f32 %v2828, %v2884
    %v2895 = vsub.f32 %v2833, %v2884
    %v2896 = vsub.f32 %v2838, %v2884
    %v2897 = vsub.f32 %v2843, %v2884
    %v2898 = vsub.f32 %v2848, %v2884
    %v2899 = vsub.f32 %v2853, %v2884
    %v2900 = vsub.f32 %v2858, %v2884
    %v2901 = vmul.f32 %v2885, %v2885
    %v2902 = vmul.f32 %v2886, %v2886
    %v2903 = vmul.f32 %v2887, %v2887
    %v2904 = vmul.f32 %v2888, %v2888
    %v2905 = vmul.f32 %v2889, %v2889
    %v2906 = vmul.f32 %v2890, %v2890
    %v2907 = vmul.f32 %v2891, %v2891
    %v2908 = vmul.f32 %v2892, %v2892
    %v2909 = vmul.f32 %v2893, %v2893
    %v2910 = vmul.f32 %v2894, %v2894
    %v2911 = vmul.f32 %v2895, %v2895
    %v2912 = vmul.f32 %v2896, %v2896
    %v2913 = vmul.f32 %v2897, %v2897
    %v2914 = vmul.f32 %v2898, %v2898
    %v2915 = vmul.f32 %v2899, %v2899
    %v2916 = vmul.f32 %v2900, %v2900
    %v2917 = vadd.f32 %v2901, %v2902
    %v2918 = vadd.f32 %v2917, %v2903
    %v2919 = vadd.f32 %v2918, %v2904
    %v2920 = vadd.f32 %v2919, %v2905
    %v2921 = vadd.f32 %v2920, %v2906
    %v2922 = vadd.f32 %v2921, %v2907
    %v2923 = vadd.f32 %v2922, %v2908
    %v2924 = vadd.f32 %v2923, %v2909
    %v2925 = vadd.f32 %v2924, %v2910
    %v2926 = vadd.f32 %v2925, %v2911
    %v2927 = vadd.f32 %v2926, %v2912
    %v2928 = vadd.f32 %v2927, %v2913
    %v2929 = vadd.f32 %v2928, %v2914
    %v2930 = vadd.f32 %v2929, %v2915
    %v2931 = vadd.f32 %v2930, %v2916
    %v2932 = vrot.slane %v2931, 4
    %v2933 = vadd.f32 %v2931, %v2932
    %v2934 = vrot.slane %v2933, 2
    %v2935 = vadd.f32 %v2933, %v2934
    %v2936 = vrot.slane %v2935, 1
    %v2937 = vadd.f32 %v2935, %v2936
    %v2938 = vmul.f32 %v2937, %v1814
    %v2939 = vadd.f32 %v2938, 1e-05
    %v2940 = vrsqrt.pop %v2939
    %v2941 = vmul.f32 %v2861, %v2940
    %v2942 = vmul.f32 %v2884, %v2941
    %v2943 = vsub.f32 %v2862, %v2942
    %v2945 = vlaneseq
    %v2946 = vshrl.u32 %v2945, 7
    %v2947 = vsub.s32 0, %v2946
    %v2948 = vrot.slane %v2941, %v2947
    %v2950 = vmul.f32 %v2783, %v2948
    %v2951 = vmul.f32 %v2788, %v2948
    %v2952 = vmul.f32 %v2793, %v2948
    %v2953 = vmul.f32 %v2798, %v2948
    %v2954 = vmul.f32 %v2803, %v2948
    %v2955 = vmul.f32 %v2808, %v2948
    %v2956 = vmul.f32 %v2813, %v2948
    %v2957 = vmul.f32 %v2818, %v2948
    %v2958 = vmul.f32 %v2823, %v2948
    %v2959 = vmul.f32 %v2828, %v2948
    %v2960 = vmul.f32 %v2833, %v2948
    %v2961 = vmul.f32 %v2838, %v2948
    %v2962 = vmul.f32 %v2843, %v2948
    %v2963 = vmul.f32 %v2848, %v2948
    %v2964 = vmul.f32 %v2853, %v2948
    %v2965 = vmul.f32 %v2858, %v2948
    %v2967 = vlaneseq
    %v2968 = vshrl.u32 %v2967, 7
    %v2969 = vsub.s32 0, %v2968
    %v2970 = vrot.slane %v2943, %v2969
    %v2972 = vadd.f32 %v2950, %v2970
    %v2973 = vadd.f32 %v2951, %v2970
    %v2974 = vadd.f32 %v2952, %v2970
    %v2975 = vadd.f32 %v2953, %v2970
    %v2976 = vadd.f32 %v2954, %v2970
    %v2977 = vadd.f32 %v2955, %v2970
    %v2978 = vadd.f32 %v2956, %v2970
    %v2979 = vadd.f32 %v2957, %v2970
    %v2980 = vadd.f32 %v2958, %v2970
    %v2981 = vadd.f32 %v2959, %v2970
    %v2982 = vadd.f32 %v2960, %v2970
    %v2983 = vadd.f32 %v2961, %v2970
    %v2984 = vadd.f32 %v2962, %v2970
    %v2985 = vadd.f32 %v2963, %v2970
    %v2986 = vadd.f32 %v2964, %v2970
    %v2987 = vadd.f32 %v2965, %v2970
    %v2988 = vmax.f32 %v2972, 0.0
    %v2989 = vmax.f32 %v2973, 0.0
    %v2990 = vmax.f32 %v2974, 0.0
    %v2991 = vmax.f32 %v2975, 0.0
    %v2992 = vmax.f32 %v2976, 0.0
    %v2993 = vmax.f32 %v2977, 0.0
    %v2994 = vmax.f32 %v2978, 0.0
    %v2995 = vmax.f32 %v2979, 0.0
    %v2996 = vmax.f32 %v2980, 0.0
    %v2997 = vmax.f32 %v2981, 0.0
    %v2998 = vmax.f32 %v2982, 0.0
    %v2999 = vmax.f32 %v2983, 0.0
    %v3000 = vmax.f32 %v2984, 0.0
    %v3001 = vmax.f32 %v2985, 0.0
    %v3002 = vmax.f32 %v2986, 0.0
    %v3003 = vmax.f32 %v2987, 0.0
    %3004 = vst [vmem:[#allocation5] sm:$0xff] %v2988
    %3005 = vst [vmem:[#allocation5 + $0x8] sm:$0xff] %v2989
    %3006 = vst [vmem:[#allocation5 + $0x10] sm:$0xff] %v2990
    %3007 = vst [vmem:[#allocation5 + $0x18] sm:$0xff] %v2991
    %3008 = vst [vmem:[#allocation5 + $0x20] sm:$0xff] %v2992
    %3009 = vst [vmem:[#allocation5 + $0x28] sm:$0xff] %v2993
    %3010 = vst [vmem:[#allocation5 + $0x30] sm:$0xff] %v2994
    %3011 = vst [vmem:[#allocation5 + $0x38] sm:$0xff] %v2995
    %3012 = vst [vmem:[#allocation5 + $0x40] sm:$0xff] %v2996
    %3013 = vst [vmem:[#allocation5 + $0x48] sm:$0xff] %v2997
    %3014 = vst [vmem:[#allocation5 + $0x50] sm:$0xff] %v2998
    %3015 = vst [vmem:[#allocation5 + $0x58] sm:$0xff] %v2999
    %3016 = vst [vmem:[#allocation5 + $0x60] sm:$0xff] %v3000
    %3017 = vst [vmem:[#allocation5 + $0x68] sm:$0xff] %v3001
    %3018 = vst [vmem:[#allocation5 + $0x70] sm:$0xff] %v3002
    %3019 = vst [vmem:[#allocation5 + $0x78] sm:$0xff] %v3003
    // Predicated region
    $region34: #{tpu_custom_call.1} parent=1 // pred_check
      _
    $region35: #{tpu_custom_call.1} parent=1 // pred_check_branch
      %3021 = sbr.rel (0) target = $region37
    $region36: #{tpu_custom_call.1} parent=1 // pred_region
      %s3023 = ssub.s32 2048, 2048
      %3024 = vsyncadd [#allocation4], %s3023
      %s3025 = sshll.u32 [#allocation5], 4
      %s3026 = int_to_ptr.vmem [resolvable:$true] %s3025
      %3031 = dma.vmem_to_hbm [thread:$0]  %s3026, 2048, %s7, [#allocation4], 128, 128, 8
    $region37: #{tpu_custom_call.1} parent=1 // pred_fallthru
      _
    // Predicated region
    $region38: #{tpu_custom_call.1} parent=1 // pred_check
      _
    $region39: #{tpu_custom_call.1} parent=1 // pred_check_branch
      %3033 = sbr.rel (0) target = $region41
    $region40: #{tpu_custom_call.1} parent=1 // pred_region
      %3034 = dma.done [#allocation4], 2048
    $region41: #{tpu_custom_call.1} parent=1 // pred_fallthru
      _
    %3035 = vsyncpa [#allocation3], 1
    %3036 = vsyncpa [#allocation4], 1

</llo_original>
